<compile_context>
chip_gen: v6e
topology: v6e:2x2x1
jax: 0.10.0
libtpu: 0.0.40
codegen_flags: <defaults>
</compile_context>

<pallas_src>
import functools

import numpy as np
import jax
import jax.numpy as jnp
from jax import lax
from jax.experimental import pallas as pl
from jax.experimental.pallas import tpu as pltpu


# ---------------------------------------------------------------------------
# Fused kernel: Linear + NCHW relayout + separable bilinear resize
# (one grid step produces one slab of oh rows of the final output).
# ---------------------------------------------------------------------------
def decoder_kernel(xt_ref, w_ref, b_ref, ah_ref, awt_ref, o_ref, z_scr):
    # xt_ref : (B, C, N)          activations, channel-major (N = H*W)
    # w_ref  : (Cout, C)          nn.Linear weight (native PyTorch layout)
    # b_ref  : (Cout, 1)          nn.Linear bias
    # ah_ref : (UH, H)            rows of the H-axis bilinear operator (this slab)
    # awt_ref: (W, OUT)           W-axis bilinear operator, pre-transposed
    # o_ref  : (B, Cout, UH, OUT) output slab (ow stays on lanes)
    # z_scr  : (B, Cout, H, W)    f32 VMEM scratch (re-tiling buffer, ~2 KiB)
    B, Cout, H, W = z_scr.shape
    UH = ah_ref.shape[0]
    OUT = awt_ref.shape[1]

    # --- 1) Linear: z[b, c, n] = sum_k W[c, k] * x[b, n, k] + bias[c] --------
    # One (Cout, C) @ (C, N) MXU matmul per batch element (B tiny, static).
    # Re-tile the (Cout, N) row block to (Cout, H, W) via the scratch using
    # static lane slices + sliced stores (avoids a lane-splitting reshape).
    for b in range(B):
        zb = jnp.dot(w_ref[...], xt_ref[b],
                     preferred_element_type=jnp.float32) + b_ref[...]    # (Cout, N)
        for h in range(H):
            z_scr[b, :, h, :] = zb[:, h * W:(h + 1) * W]

    # --- 2) Resize along H: V[bc, u, w] = sum_h Ah[u, h] * z[bc, h, w] -------
    # Standard batched matmul (batch = B*Cout): 'buh,bhw->buw'.
    z = z_scr[...].reshape(B * Cout, H, W)
    ah_b = jnp.broadcast_to(ah_ref[...], (B * Cout, UH, H))
    v = lax.dot_general(ah_b, z, (((2,), (1,)), ((0,), (0,))),
                        preferred_element_type=jnp.float32)              # (BC, UH, W)

    # --- 3) Resize along W: O[bc, u, v] = sum_w V[bc, u, w] * AwT[w, v] ------
    # Rows are already in (b, c, oh) order with ow on lanes, i.e. the final
    # NCHW layout -- no transpose anywhere.
    awt_b = jnp.broadcast_to(awt_ref[...], (B * Cout, W, OUT))
    o = lax.dot_general(v, awt_b, (((2,), (1,)), ((0,), (0,))),
                        preferred_element_type=jnp.float32)              # (BC, UH, OUT)
    o_ref[...] = o.reshape(B, Cout, UH, OUT).astype(o_ref.dtype)


# ---------------------------------------------------------------------------
# Host-side helpers
# ---------------------------------------------------------------------------
def bilinear_matrix(in_size: int, out_size: int) -> np.ndarray:
    """1-D interpolation matrix matching F.interpolate(mode='bilinear',
    align_corners=False): half-pixel centers, negatives clamped to 0."""
    scale = in_size / out_size
    dst = np.arange(out_size, dtype=np.float64)
    src = np.maximum((dst + 0.5) * scale - 0.5, 0.0)
    i0 = np.minimum(np.floor(src).astype(np.int64), in_size - 1)
    i1 = np.minimum(i0 + 1, in_size - 1)
    w1 = src - i0
    w0 = 1.0 - w1
    m = np.zeros((out_size, in_size), dtype=np.float64)
    rows = np.arange(out_size)
    np.add.at(m, (rows, i0), w0)
    np.add.at(m, (rows, i1), w1)
    return m.astype(np.float32)                                  # (out_size, in_size)


@functools.lru_cache(maxsize=None)
def _resize_operators(h: int, w: int, out_size: int):
    """A_h (out, h) and A_w^T (w, out); built once per shape, kept on device."""
    ah = bilinear_matrix(h, out_size)                            # (out, h)
    awt = np.ascontiguousarray(bilinear_matrix(w, out_size).T)   # (w, out)
    return jnp.asarray(ah), jnp.asarray(awt)


def mlp_decoder(x, weight, bias, hw_shape, out_size=64):
    """x: (B, N, C); weight: (Cout, C) (PyTorch nn.Linear layout); bias: (Cout,).
    Returns (B, Cout, out_size, out_size) -- same as MLPDecoder.forward."""
    B, N, C = x.shape
    H, W = hw_shape
    assert N == H * W, (N, H, W)
    Cout = weight.shape[0]

    ah, awt = _resize_operators(H, W, out_size)

    # Split the output oh-rows into GU slabs (parallel grid axis) so the work
    # shards across TensorCores on multi-core chips; every other operand has a
    # constant index_map and stays resident.
    gu = 2 if out_size % 2 == 0 else 1
    uh = out_size // gu

    # Feed the linear K-contiguous; this XLA transpose fuses upstream.
    xt = jnp.transpose(x, (0, 2, 1))                             # (B, C, N)
    bias2d = bias.reshape(Cout, 1)

    itemsize = jnp.dtype(x.dtype).itemsize
    out_block = B * Cout * uh * out_size * itemsize
    resident = (xt.size + weight.size + bias2d.size + ah.size + awt.size) * 4
    scratch = B * Cout * H * W * 4
    vmem_limit = int(min(max(4 * (2 * (resident + out_block) + scratch),
                             4 * 1024 * 1024),
                         64 * 1024 * 1024))

    cost = pl.CostEstimate(
        flops=2 * B * Cout * (C * N + out_size * H * W + out_size * out_size * W),
        transcendentals=0,
        bytes_accessed=(x.size + weight.size + bias.size + ah.size + awt.size) * 4
                       + B * Cout * out_size * out_size * itemsize)

    return pl.pallas_call(
        decoder_kernel,
        out_shape=jax.ShapeDtypeStruct((B, Cout, out_size, out_size), x.dtype),
        grid=(gu,),
        in_specs=[
            pl.BlockSpec((B, C, N), lambda i: (0, 0, 0)),        # x^T   (resident)
            pl.BlockSpec((Cout, C), lambda i: (0, 0)),           # W     (resident)
            pl.BlockSpec((Cout, 1), lambda i: (0, 0)),           # bias  (resident)
            pl.BlockSpec((uh, H), lambda i: (i, 0)),             # A_h rows, this slab
            pl.BlockSpec((W, out_size), lambda i: (0, 0)),       # A_w^T (resident)
        ],
        out_specs=pl.BlockSpec((B, Cout, uh, out_size), lambda i: (0, 0, i, 0)),
        scratch_shapes=[pltpu.VMEM((B, Cout, H, W), jnp.float32)],
        compiler_params=pltpu.CompilerParams(
            dimension_semantics=("parallel",),
            vmem_limit_bytes=vmem_limit),
        cost_estimate=cost,
    )(xt, weight, bias2d, ah, awt)


# ---------------------------------------------------------------------------
# Demo + self-check
# ---------------------------------------------------------------------------
if __name__ == "__main__":
    # Small shapes consistent with the module: B=2, H=W=8 -> N=64 tokens,
    # embed_dim=32, out_channels (num_classes)=4.
    B, H, W = 2, 8, 8
    N = H * W
    embed_dim, out_channels = 32, 4

    key = jax.random.PRNGKey(0)
    kx, kw, kb = jax.random.split(key, 3)
    x = jax.random.normal(kx, (B, N, embed_dim), dtype=jnp.float32)
    weight = (jax.random.normal(kw, (out_channels, embed_dim), dtype=jnp.float32)
              * 0.02)
    bias = jax.random.normal(kb, (out_channels,), dtype=jnp.float32) * 0.02

    out = jax.block_until_ready(mlp_decoder(x, weight, bias, (H, W), out_size=64))
    assert out.shape == (B, out_channels, 64, 64), out.shape
    assert out.dtype == jnp.float32

    # Pure-JAX reference: linear, permute/view, separable bilinear resize.
    y_ref = x @ weight.T + bias                                   # (B, N, Cout)
    z_ref = jnp.transpose(y_ref, (0, 2, 1)).reshape(B * out_channels, H, W)
    ah_ref = jnp.asarray(bilinear_matrix(H, 64))
    aw_ref = jnp.asarray(bilinear_matrix(W, 64))
    ref = jnp.einsum('oh,phw,vw->pov', ah_ref, z_ref, aw_ref)
    ref = ref.reshape(B, out_channels, 64, 64)
    err = float(jnp.max(jnp.abs(out - ref)))
    assert jnp.allclose(out, ref, rtol=1e-4, atol=1e-5), err

    print("KERNEL_OK")
</pallas_src>

<mosaic_0001>
module attributes {stable_mosaic.version = 11 : i64} {
  func.func @decoder_kernel(%arg0: i32, %arg1: memref<2x32x64xf32, #tpu.memory_space<vmem>>, %arg2: memref<4x32xf32, #tpu.memory_space<vmem>>, %arg3: memref<4x1xf32, #tpu.memory_space<vmem>>, %arg4: memref<32x8xf32, #tpu.memory_space<vmem>>, %arg5: memref<8x64xf32, #tpu.memory_space<vmem>>, %arg6: memref<2x4x32x64xf32, #tpu.memory_space<vmem>>, %arg7: memref<2x4x8x8xf32, #tpu.memory_space<vmem>>) attributes {dimension_semantics = [#tpu.dimension_semantics<parallel>], iteration_bounds = array<i64: 2>, scalar_prefetch = 0 : i64, scratch_operands = 1 : i64, tpu.core_type = #tpu.core_type<tc>, window_params = [{pipeline_mode = #tpu.pipeline_mode<synchronous>, transform_indices = @transform_0, window_bounds = array<i64: 2, 32, 64>}, {pipeline_mode = #tpu.pipeline_mode<synchronous>, transform_indices = @transform_1, window_bounds = array<i64: 4, 32>}, {pipeline_mode = #tpu.pipeline_mode<synchronous>, transform_indices = @transform_2, window_bounds = array<i64: 4, 1>}, {transform_indices = @transform_3, window_bounds = array<i64: 32, 8>}, {pipeline_mode = #tpu.pipeline_mode<synchronous>, transform_indices = @transform_4, window_bounds = array<i64: 8, 64>}, {transform_indices = @transform_5, window_bounds = array<i64: 2, 4, 32, 64>}]} {
    %c0 = arith.constant 0 : index
    %c0_0 = arith.constant 0 : index
    %0 = vector.load %arg2[%c0, %c0_0] : memref<4x32xf32, #tpu.memory_space<vmem>>, vector<4x32xf32>
    %c0_1 = arith.constant 0 : index
    %c0_2 = arith.constant 0 : index
    %c0_3 = arith.constant 0 : index
    %1 = vector.load %arg1[%c0_1, %c0_2, %c0_3] : memref<2x32x64xf32, #tpu.memory_space<vmem>>, vector<1x32x64xf32>
    %2 = vector.shape_cast %1 : vector<1x32x64xf32> to vector<32x64xf32>
    %cst = arith.constant dense<0.000000e+00> : vector<4x64xf32>
    %3 = tpu.matmul %0, %2, %cst {dimension_numbers = #tpu.dot_dimension_numbers<[1], [0], [0], [1], [0, 0, 1, 1], [], []>} : vector<4x32xf32>, vector<32x64xf32>, vector<4x64xf32> -> vector<4x64xf32>
    %c0_4 = arith.constant 0 : index
    %c0_5 = arith.constant 0 : index
    %4 = vector.load %arg3[%c0_4, %c0_5] : memref<4x1xf32, #tpu.memory_space<vmem>>, vector<4x1xf32>
    %5 = vector.broadcast %4 : vector<4x1xf32> to vector<4x64xf32>
    %6 = arith.addf %3, %5 : vector<4x64xf32>
    %7 = vector.extract_strided_slice %6 {offsets = [0, 0], sizes = [4, 8], strides = [1, 1]} : vector<4x64xf32> to vector<4x8xf32>
    %c0_6 = arith.constant 0 : index
    %c0_7 = arith.constant 0 : index
    %c0_8 = arith.constant 0 : index
    %c0_9 = arith.constant 0 : index
    %8 = vector.load %arg7[%c0_6, %c0_7, %c0_8, %c0_9] : memref<2x4x8x8xf32, #tpu.memory_space<vmem>>, vector<1x4x1x8xf32>
    %9 = vector.shape_cast %8 : vector<1x4x1x8xf32> to vector<4x8xf32>
    %10 = vector.shape_cast %7 : vector<4x8xf32> to vector<1x4x1x8xf32>
    tpu.vector_store %arg7[%c0_6, %c0_7, %c0_8, %c0_9], %10 {strides = array<i32>} : memref<2x4x8x8xf32, #tpu.memory_space<vmem>>, vector<1x4x1x8xf32>,
    %11 = vector.extract_strided_slice %6 {offsets = [0, 8], sizes = [4, 8], strides = [1, 1]} : vector<4x64xf32> to vector<4x8xf32>
    %c0_10 = arith.constant 0 : index
    %c0_11 = arith.constant 0 : index
    %c1 = arith.constant 1 : index
    %c0_12 = arith.constant 0 : index
    %12 = vector.load %arg7[%c0_10, %c0_11, %c1, %c0_12] : memref<2x4x8x8xf32, #tpu.memory_space<vmem>>, vector<1x4x1x8xf32>
    %13 = vector.shape_cast %12 : vector<1x4x1x8xf32> to vector<4x8xf32>
    %14 = vector.shape_cast %11 : vector<4x8xf32> to vector<1x4x1x8xf32>
    tpu.vector_store %arg7[%c0_10, %c0_11, %c1, %c0_12], %14 {strides = array<i32>} : memref<2x4x8x8xf32, #tpu.memory_space<vmem>>, vector<1x4x1x8xf32>,
    %15 = vector.extract_strided_slice %6 {offsets = [0, 16], sizes = [4, 8], strides = [1, 1]} : vector<4x64xf32> to vector<4x8xf32>
    %c0_13 = arith.constant 0 : index
    %c0_14 = arith.constant 0 : index
    %c2 = arith.constant 2 : index
    %c0_15 = arith.constant 0 : index
    %16 = vector.load %arg7[%c0_13, %c0_14, %c2, %c0_15] : memref<2x4x8x8xf32, #tpu.memory_space<vmem>>, vector<1x4x1x8xf32>
    %17 = vector.shape_cast %16 : vector<1x4x1x8xf32> to vector<4x8xf32>
    %18 = vector.shape_cast %15 : vector<4x8xf32> to vector<1x4x1x8xf32>
    tpu.vector_store %arg7[%c0_13, %c0_14, %c2, %c0_15], %18 {strides = array<i32>} : memref<2x4x8x8xf32, #tpu.memory_space<vmem>>, vector<1x4x1x8xf32>,
    %19 = vector.extract_strided_slice %6 {offsets = [0, 24], sizes = [4, 8], strides = [1, 1]} : vector<4x64xf32> to vector<4x8xf32>
    %c0_16 = arith.constant 0 : index
    %c0_17 = arith.constant 0 : index
    %c3 = arith.constant 3 : index
    %c0_18 = arith.constant 0 : index
    %20 = vector.load %arg7[%c0_16, %c0_17, %c3, %c0_18] : memref<2x4x8x8xf32, #tpu.memory_space<vmem>>, vector<1x4x1x8xf32>
    %21 = vector.shape_cast %20 : vector<1x4x1x8xf32> to vector<4x8xf32>
    %22 = vector.shape_cast %19 : vector<4x8xf32> to vector<1x4x1x8xf32>
    tpu.vector_store %arg7[%c0_16, %c0_17, %c3, %c0_18], %22 {strides = array<i32>} : memref<2x4x8x8xf32, #tpu.memory_space<vmem>>, vector<1x4x1x8xf32>,
    %23 = vector.extract_strided_slice %6 {offsets = [0, 32], sizes = [4, 8], strides = [1, 1]} : vector<4x64xf32> to vector<4x8xf32>
    %c0_19 = arith.constant 0 : index
    %c0_20 = arith.constant 0 : index
    %c4 = arith.constant 4 : index
    %c0_21 = arith.constant 0 : index
    %24 = vector.load %arg7[%c0_19, %c0_20, %c4, %c0_21] : memref<2x4x8x8xf32, #tpu.memory_space<vmem>>, vector<1x4x1x8xf32>
    %25 = vector.shape_cast %24 : vector<1x4x1x8xf32> to vector<4x8xf32>
    %26 = vector.shape_cast %23 : vector<4x8xf32> to vector<1x4x1x8xf32>
    tpu.vector_store %arg7[%c0_19, %c0_20, %c4, %c0_21], %26 {strides = array<i32>} : memref<2x4x8x8xf32, #tpu.memory_space<vmem>>, vector<1x4x1x8xf32>,
    %27 = vector.extract_strided_slice %6 {offsets = [0, 40], sizes = [4, 8], strides = [1, 1]} : vector<4x64xf32> to vector<4x8xf32>
    %c0_22 = arith.constant 0 : index
    %c0_23 = arith.constant 0 : index
    %c5 = arith.constant 5 : index
    %c0_24 = arith.constant 0 : index
    %28 = vector.load %arg7[%c0_22, %c0_23, %c5, %c0_24] : memref<2x4x8x8xf32, #tpu.memory_space<vmem>>, vector<1x4x1x8xf32>
    %29 = vector.shape_cast %28 : vector<1x4x1x8xf32> to vector<4x8xf32>
    %30 = vector.shape_cast %27 : vector<4x8xf32> to vector<1x4x1x8xf32>
    tpu.vector_store %arg7[%c0_22, %c0_23, %c5, %c0_24], %30 {strides = array<i32>} : memref<2x4x8x8xf32, #tpu.memory_space<vmem>>, vector<1x4x1x8xf32>,
    %31 = vector.extract_strided_slice %6 {offsets = [0, 48], sizes = [4, 8], strides = [1, 1]} : vector<4x64xf32> to vector<4x8xf32>
    %c0_25 = arith.constant 0 : index
    %c0_26 = arith.constant 0 : index
    %c6 = arith.constant 6 : index
    %c0_27 = arith.constant 0 : index
    %32 = vector.load %arg7[%c0_25, %c0_26, %c6, %c0_27] : memref<2x4x8x8xf32, #tpu.memory_space<vmem>>, vector<1x4x1x8xf32>
    %33 = vector.shape_cast %32 : vector<1x4x1x8xf32> to vector<4x8xf32>
    %34 = vector.shape_cast %31 : vector<4x8xf32> to vector<1x4x1x8xf32>
    tpu.vector_store %arg7[%c0_25, %c0_26, %c6, %c0_27], %34 {strides = array<i32>} : memref<2x4x8x8xf32, #tpu.memory_space<vmem>>, vector<1x4x1x8xf32>,
    %35 = vector.extract_strided_slice %6 {offsets = [0, 56], sizes = [4, 8], strides = [1, 1]} : vector<4x64xf32> to vector<4x8xf32>
    %c0_28 = arith.constant 0 : index
    %c0_29 = arith.constant 0 : index
    %c7 = arith.constant 7 : index
    %c0_30 = arith.constant 0 : index
    %36 = vector.load %arg7[%c0_28, %c0_29, %c7, %c0_30] : memref<2x4x8x8xf32, #tpu.memory_space<vmem>>, vector<1x4x1x8xf32>
    %37 = vector.shape_cast %36 : vector<1x4x1x8xf32> to vector<4x8xf32>
    %38 = vector.shape_cast %35 : vector<4x8xf32> to vector<1x4x1x8xf32>
    tpu.vector_store %arg7[%c0_28, %c0_29, %c7, %c0_30], %38 {strides = array<i32>} : memref<2x4x8x8xf32, #tpu.memory_space<vmem>>, vector<1x4x1x8xf32>,
    %c0_31 = arith.constant 0 : index
    %c0_32 = arith.constant 0 : index
    %39 = vector.load %arg2[%c0_31, %c0_32] : memref<4x32xf32, #tpu.memory_space<vmem>>, vector<4x32xf32>
    %c1_33 = arith.constant 1 : index
    %c0_34 = arith.constant 0 : index
    %c0_35 = arith.constant 0 : index
    %40 = vector.load %arg1[%c1_33, %c0_34, %c0_35] : memref<2x32x64xf32, #tpu.memory_space<vmem>>, vector<1x32x64xf32>
    %41 = vector.shape_cast %40 : vector<1x32x64xf32> to vector<32x64xf32>
    %cst_36 = arith.constant dense<0.000000e+00> : vector<4x64xf32>
    %42 = tpu.matmul %39, %41, %cst_36 {dimension_numbers = #tpu.dot_dimension_numbers<[1], [0], [0], [1], [0, 0, 1, 1], [], []>} : vector<4x32xf32>, vector<32x64xf32>, vector<4x64xf32> -> vector<4x64xf32>
    %c0_37 = arith.constant 0 : index
    %c0_38 = arith.constant 0 : index
    %43 = vector.load %arg3[%c0_37, %c0_38] : memref<4x1xf32, #tpu.memory_space<vmem>>, vector<4x1xf32>
    %44 = vector.broadcast %43 : vector<4x1xf32> to vector<4x64xf32>
    %45 = arith.addf %42, %44 : vector<4x64xf32>
    %46 = vector.extract_strided_slice %45 {offsets = [0, 0], sizes = [4, 8], strides = [1, 1]} : vector<4x64xf32> to vector<4x8xf32>
    %c1_39 = arith.constant 1 : index
    %c0_40 = arith.constant 0 : index
    %c0_41 = arith.constant 0 : index
    %c0_42 = arith.constant 0 : index
    %47 = vector.load %arg7[%c1_39, %c0_40, %c0_41, %c0_42] : memref<2x4x8x8xf32, #tpu.memory_space<vmem>>, vector<1x4x1x8xf32>
    %48 = vector.shape_cast %47 : vector<1x4x1x8xf32> to vector<4x8xf32>
    %49 = vector.shape_cast %46 : vector<4x8xf32> to vector<1x4x1x8xf32>
    tpu.vector_store %arg7[%c1_39, %c0_40, %c0_41, %c0_42], %49 {strides = array<i32>} : memref<2x4x8x8xf32, #tpu.memory_space<vmem>>, vector<1x4x1x8xf32>,
    %50 = vector.extract_strided_slice %45 {offsets = [0, 8], sizes = [4, 8], strides = [1, 1]} : vector<4x64xf32> to vector<4x8xf32>
    %c1_43 = arith.constant 1 : index
    %c0_44 = arith.constant 0 : index
    %c1_45 = arith.constant 1 : index
    %c0_46 = arith.constant 0 : index
    %51 = vector.load %arg7[%c1_43, %c0_44, %c1_45, %c0_46] : memref<2x4x8x8xf32, #tpu.memory_space<vmem>>, vector<1x4x1x8xf32>
    %52 = vector.shape_cast %51 : vector<1x4x1x8xf32> to vector<4x8xf32>
    %53 = vector.shape_cast %50 : vector<4x8xf32> to vector<1x4x1x8xf32>
    tpu.vector_store %arg7[%c1_43, %c0_44, %c1_45, %c0_46], %53 {strides = array<i32>} : memref<2x4x8x8xf32, #tpu.memory_space<vmem>>, vector<1x4x1x8xf32>,
    %54 = vector.extract_strided_slice %45 {offsets = [0, 16], sizes = [4, 8], strides = [1, 1]} : vector<4x64xf32> to vector<4x8xf32>
    %c1_47 = arith.constant 1 : index
    %c0_48 = arith.constant 0 : index
    %c2_49 = arith.constant 2 : index
    %c0_50 = arith.constant 0 : index
    %55 = vector.load %arg7[%c1_47, %c0_48, %c2_49, %c0_50] : memref<2x4x8x8xf32, #tpu.memory_space<vmem>>, vector<1x4x1x8xf32>
    %56 = vector.shape_cast %55 : vector<1x4x1x8xf32> to vector<4x8xf32>
    %57 = vector.shape_cast %54 : vector<4x8xf32> to vector<1x4x1x8xf32>
    tpu.vector_store %arg7[%c1_47, %c0_48, %c2_49, %c0_50], %57 {strides = array<i32>} : memref<2x4x8x8xf32, #tpu.memory_space<vmem>>, vector<1x4x1x8xf32>,
    %58 = vector.extract_strided_slice %45 {offsets = [0, 24], sizes = [4, 8], strides = [1, 1]} : vector<4x64xf32> to vector<4x8xf32>
    %c1_51 = arith.constant 1 : index
    %c0_52 = arith.constant 0 : index
    %c3_53 = arith.constant 3 : index
    %c0_54 = arith.constant 0 : index
    %59 = vector.load %arg7[%c1_51, %c0_52, %c3_53, %c0_54] : memref<2x4x8x8xf32, #tpu.memory_space<vmem>>, vector<1x4x1x8xf32>
    %60 = vector.shape_cast %59 : vector<1x4x1x8xf32> to vector<4x8xf32>
    %61 = vector.shape_cast %58 : vector<4x8xf32> to vector<1x4x1x8xf32>
    tpu.vector_store %arg7[%c1_51, %c0_52, %c3_53, %c0_54], %61 {strides = array<i32>} : memref<2x4x8x8xf32, #tpu.memory_space<vmem>>, vector<1x4x1x8xf32>,
    %62 = vector.extract_strided_slice %45 {offsets = [0, 32], sizes = [4, 8], strides = [1, 1]} : vector<4x64xf32> to vector<4x8xf32>
    %c1_55 = arith.constant 1 : index
    %c0_56 = arith.constant 0 : index
    %c4_57 = arith.constant 4 : index
    %c0_58 = arith.constant 0 : index
    %63 = vector.load %arg7[%c1_55, %c0_56, %c4_57, %c0_58] : memref<2x4x8x8xf32, #tpu.memory_space<vmem>>, vector<1x4x1x8xf32>
    %64 = vector.shape_cast %63 : vector<1x4x1x8xf32> to vector<4x8xf32>
    %65 = vector.shape_cast %62 : vector<4x8xf32> to vector<1x4x1x8xf32>
    tpu.vector_store %arg7[%c1_55, %c0_56, %c4_57, %c0_58], %65 {strides = array<i32>} : memref<2x4x8x8xf32, #tpu.memory_space<vmem>>, vector<1x4x1x8xf32>,
    %66 = vector.extract_strided_slice %45 {offsets = [0, 40], sizes = [4, 8], strides = [1, 1]} : vector<4x64xf32> to vector<4x8xf32>
    %c1_59 = arith.constant 1 : index
    %c0_60 = arith.constant 0 : index
    %c5_61 = arith.constant 5 : index
    %c0_62 = arith.constant 0 : index
    %67 = vector.load %arg7[%c1_59, %c0_60, %c5_61, %c0_62] : memref<2x4x8x8xf32, #tpu.memory_space<vmem>>, vector<1x4x1x8xf32>
    %68 = vector.shape_cast %67 : vector<1x4x1x8xf32> to vector<4x8xf32>
    %69 = vector.shape_cast %66 : vector<4x8xf32> to vector<1x4x1x8xf32>
    tpu.vector_store %arg7[%c1_59, %c0_60, %c5_61, %c0_62], %69 {strides = array<i32>} : memref<2x4x8x8xf32, #tpu.memory_space<vmem>>, vector<1x4x1x8xf32>,
    %70 = vector.extract_strided_slice %45 {offsets = [0, 48], sizes = [4, 8], strides = [1, 1]} : vector<4x64xf32> to vector<4x8xf32>
    %c1_63 = arith.constant 1 : index
    %c0_64 = arith.constant 0 : index
    %c6_65 = arith.constant 6 : index
    %c0_66 = arith.constant 0 : index
    %71 = vector.load %arg7[%c1_63, %c0_64, %c6_65, %c0_66] : memref<2x4x8x8xf32, #tpu.memory_space<vmem>>, vector<1x4x1x8xf32>
    %72 = vector.shape_cast %71 : vector<1x4x1x8xf32> to vector<4x8xf32>
    %73 = vector.shape_cast %70 : vector<4x8xf32> to vector<1x4x1x8xf32>
    tpu.vector_store %arg7[%c1_63, %c0_64, %c6_65, %c0_66], %73 {strides = array<i32>} : memref<2x4x8x8xf32, #tpu.memory_space<vmem>>, vector<1x4x1x8xf32>,
    %74 = vector.extract_strided_slice %45 {offsets = [0, 56], sizes = [4, 8], strides = [1, 1]} : vector<4x64xf32> to vector<4x8xf32>
    %c1_67 = arith.constant 1 : index
    %c0_68 = arith.constant 0 : index
    %c7_69 = arith.constant 7 : index
    %c0_70 = arith.constant 0 : index
    %75 = vector.load %arg7[%c1_67, %c0_68, %c7_69, %c0_70] : memref<2x4x8x8xf32, #tpu.memory_space<vmem>>, vector<1x4x1x8xf32>
    %76 = vector.shape_cast %75 : vector<1x4x1x8xf32> to vector<4x8xf32>
    %77 = vector.shape_cast %74 : vector<4x8xf32> to vector<1x4x1x8xf32>
    tpu.vector_store %arg7[%c1_67, %c0_68, %c7_69, %c0_70], %77 {strides = array<i32>} : memref<2x4x8x8xf32, #tpu.memory_space<vmem>>, vector<1x4x1x8xf32>,
    %c0_71 = arith.constant 0 : index
    %c0_72 = arith.constant 0 : index
    %c0_73 = arith.constant 0 : index
    %c0_74 = arith.constant 0 : index
    %78 = vector.load %arg7[%c0_71, %c0_72, %c0_73, %c0_74] : memref<2x4x8x8xf32, #tpu.memory_space<vmem>>, vector<2x4x8x8xf32>
    %79 = vector.shape_cast %78 : vector<2x4x8x8xf32> to vector<8x8x8xf32>
    %c0_75 = arith.constant 0 : index
    %c0_76 = arith.constant 0 : index
    %80 = vector.load %arg4[%c0_75, %c0_76] : memref<32x8xf32, #tpu.memory_space<vmem>>, vector<32x8xf32>
    %81 = vector.shape_cast %80 : vector<32x8xf32> to vector<1x32x8xf32>
    %82 = vector.broadcast %81 : vector<1x32x8xf32> to vector<8x32x8xf32>
    %cst_77 = arith.constant dense<0.000000e+00> : vector<8x32x8xf32>
    %83 = tpu.matmul %82, %79, %cst_77 {dimension_numbers = #tpu.dot_dimension_numbers<[2], [1], [1], [2], [0, 0, 0, 1, 1, 2], [0], [0]>} : vector<8x32x8xf32>, vector<8x8x8xf32>, vector<8x32x8xf32> -> vector<8x32x8xf32>
    %c0_78 = arith.constant 0 : index
    %c0_79 = arith.constant 0 : index
    %84 = vector.load %arg5[%c0_78, %c0_79] : memref<8x64xf32, #tpu.memory_space<vmem>>, vector<8x64xf32>
    %85 = vector.shape_cast %84 : vector<8x64xf32> to vector<1x8x64xf32>
    %86 = vector.broadcast %85 : vector<1x8x64xf32> to vector<8x8x64xf32>
    %cst_80 = arith.constant dense<0.000000e+00> : vector<8x32x64xf32>
    %87 = tpu.matmul %83, %86, %cst_80 {dimension_numbers = #tpu.dot_dimension_numbers<[2], [1], [1], [2], [0, 0, 0, 1, 1, 2], [0], [0]>} : vector<8x32x8xf32>, vector<8x8x64xf32>, vector<8x32x64xf32> -> vector<8x32x64xf32>
    %88 = vector.shape_cast %87 : vector<8x32x64xf32> to vector<2x4x32x64xf32>
    %c0_81 = arith.constant 0 : index
    %c0_82 = arith.constant 0 : index
    %c0_83 = arith.constant 0 : index
    %c0_84 = arith.constant 0 : index
    %89 = vector.load %arg6[%c0_81, %c0_82, %c0_83, %c0_84] : memref<2x4x32x64xf32, #tpu.memory_space<vmem>>, vector<2x4x32x64xf32>
    tpu.vector_store %arg6[%c0_81, %c0_82, %c0_83, %c0_84], %88 {strides = array<i32>} : memref<2x4x32x64xf32, #tpu.memory_space<vmem>>, vector<2x4x32x64xf32>,
    return
  }
  func.func @transform_0(%arg0: i32) -> (i32, i32, i32) {
    %c0_i32 = arith.constant 0 : i32
    %c0_i32_0 = arith.constant 0 : i32
    %c0_i32_1 = arith.constant 0 : i32
    %c0_i32_2 = arith.constant 0 : i32
    return %c0_i32, %c0_i32_0, %c0_i32_1 : i32, i32, i32
  }
  func.func @transform_1(%arg0: i32) -> (i32, i32) {
    %c0_i32 = arith.constant 0 : i32
    %c0_i32_0 = arith.constant 0 : i32
    %c0_i32_1 = arith.constant 0 : i32
    return %c0_i32, %c0_i32_0 : i32, i32
  }
  func.func @transform_2(%arg0: i32) -> (i32, i32) {
    %c0_i32 = arith.constant 0 : i32
    %c0_i32_0 = arith.constant 0 : i32
    %c0_i32_1 = arith.constant 0 : i32
    return %c0_i32, %c0_i32_0 : i32, i32
  }
  func.func @transform_3(%arg0: i32) -> (i32, i32) {
    %c0_i32 = arith.constant 0 : i32
    %c0_i32_0 = arith.constant 0 : i32
    return %arg0, %c0_i32 : i32, i32
  }
  func.func @transform_4(%arg0: i32) -> (i32, i32) {
    %c0_i32 = arith.constant 0 : i32
    %c0_i32_0 = arith.constant 0 : i32
    %c0_i32_1 = arith.constant 0 : i32
    return %c0_i32, %c0_i32_0 : i32, i32
  }
  func.func @transform_5(%arg0: i32) -> (i32, i32, i32, i32) {
    %c0_i32 = arith.constant 0 : i32
    %c0_i32_0 = arith.constant 0 : i32
    %c0_i32_1 = arith.constant 0 : i32
    %c0_i32_2 = arith.constant 0 : i32
    return %c0_i32, %c0_i32_0, %arg0, %c0_i32_1 : i32, i32, i32, i32
  }
}

</mosaic_0001>

<llo_original>
// kernel: tpu_custom_call.1
$region0: #{tpu_custom_call.1}
  #allocation0 [shape = 'u32[]', space=smem, size = 0x4, offset = 0x4, fixed_abs, tag = 'smem constant byte address 0x4 - core index']
  #allocation1 [shape = 'u32[144,128]{1,0:T(1,128)}', space=vmem, size = 0x12000, scoped, tag = 'internal scratch']
  #allocation2 [shape = 'f32[2,4,8,8]{3,2,1,0:T(8,128)}', space=vmem, size = 0x8000, scoped, tag = 'scratch operand']
  #allocation7 [shape = 's32[]', space=sflag, size = 0x4, offset = 0, fixed_abs, tag = 'sflag constant byte address 0x0 - dummy sync flag']
  %s0 = inlined_call_operand.vmem [shape: f32[2,32,64], index: 0, kind: input, shape index: {}]
  %s1 = inlined_call_operand.hbm [shape: f32[4,32], index: 1, kind: input, shape index: {}]
  %s2 = inlined_call_operand.vmem [shape: f32[4,1], index: 2, kind: input, shape index: {}]
  %s3 = inlined_call_operand.vmem [shape: f32[64,8], index: 3, kind: input, shape index: {}]
  %s4 = inlined_call_operand.vmem [shape: f32[8,64], index: 4, kind: input, shape index: {}]
  %s5 = inlined_call_operand.hbm [shape: f32[2,4,64,64], index: 5, kind: output, shape index: {}]
  %s6 = sld [smem:[#allocation0]]
  $region57: #{tpu_custom_call.1} parent=0
    _
  %s8 = ssub.s32 1, %s6
  %s9 = scalar_select 0, %s8, %s6
  $region1: #{tpu_custom_call.1} parent=0
    #allocation3 [shape = 'u8[2048]{0}', space=vmem, size = 0x800, scoped, tag = 'input window, operand 1, single buffered']
    #allocation4 [shape = 's32[2]{0}', space=sflag, size = 0x8, scoped, tag = 'scoped memory for tpu_custom_call.1']
    #allocation5 [shape = 's32[2]{0}', space=sflag, size = 0x8, scoped, tag = 'scoped memory for tpu_custom_call.1']
    #allocation6 [shape = 'u8[262144]{0}', space=vmem, size = 0x40000, scoped, tag = 'output window, operand 0']
    %10 = vsyncpa [#allocation4], 0
    %11 = vsyncpa [#allocation5], 0
    %s12 = scalar_lea.sflag [#allocation5], 1
    %13 = vsyncpa %s12, 0
    loop: start=0, step=1, limit=4
    $region2: #{tpu_custom_call.1} parent=1 // loop_pre_header
      _
    $region3: #{tpu_custom_call.1} parent=1 // loop_header
      %s15 = sphi 0, %s19
      %p16 = scmp.ge.s32.totalorder %s15, 4
      %s23 = sphi 0, %s23
      %s25 = sphi 0, %s23
      %s26 = sphi 0, %s25
      %s40 = sphi 0, %s26
      %s44 = sphi 0, %s44
      %s46 = sphi 0, %s44
      %s47 = sphi 0, %s46
      %s61 = sphi 0, %s47
      %s65 = sphi 0, %s65
      %s67 = sphi 0, %s65
      %s68 = sphi 0, %s67
      %s82 = sphi 0, %s68
      %s88 = sphi 0, %s90
      %s91 = sphi 0, %s88
      %s92 = sphi 0, %s91
      %s108 = sphi 0, %s92
      %s112 = sphi 0, %s112
      %s114 = sphi 0, %s112
      %s115 = sphi 0, %s114
      %s129 = sphi 0, %s115
      %s135 = sphi 0, %s137
      %s138 = sphi 0, %s135
      %s139 = sphi 0, %s138
      %s155 = sphi 0, %s139
    $region4: #{tpu_custom_call.1} parent=1 // loop_header_branch
      %18 = sbr.rel (%p16) target = $region8
    $region5: #{tpu_custom_call.1} parent=1 // loop_body
      %s20 = ssub.s32 %s15, 1
      %s21 = ssub.s32 %s15, 2
      %s22 = sadd.s32 %s15, 1
      %s24 = sadd.s32 %s23, 1
      %p27 = scmp.eq.s32.totalorder %s15, 1
      %p28 = scmp.ne.s32.totalorder %s23, %s25
      %p29 = scmp.eq.s32.totalorder %s15, 0
      %p30 = por %p28, %p29
      %p31 = scmp.ne.s32.totalorder %s23, %s25
      %p32 = scmp.eq.s32.totalorder %s20, 1
      %p33 = por %p31, %p32
      %p34 = scmp.ne.s32.totalorder %s25, %s26
      %p35 = scmp.eq.s32.totalorder %s20, 0
      %p36 = por %p34, %p35
      %p37 = scmp.ne.s32.totalorder %s25, %s26
      %p38 = scmp.eq.s32.totalorder %s21, 1
      %p39 = por %p37, %p38
      %p41 = scmp.ne.s32.totalorder %s26, %s40
      %p42 = scmp.eq.s32.totalorder %s21, 0
      %p43 = por %p41, %p42
      %s45 = sadd.s32 %s44, 1
      %p48 = scmp.eq.s32.totalorder %s15, 1
      %p49 = scmp.ne.s32.totalorder %s44, %s46
      %p50 = scmp.eq.s32.totalorder %s15, 0
      %p51 = por %p49, %p50
      %p52 = scmp.ne.s32.totalorder %s44, %s46
      %p53 = scmp.eq.s32.totalorder %s20, 1
      %p54 = por %p52, %p53
      %p55 = scmp.ne.s32.totalorder %s46, %s47
      %p56 = scmp.eq.s32.totalorder %s20, 0
      %p57 = por %p55, %p56
      %p58 = scmp.ne.s32.totalorder %s46, %s47
      %p59 = scmp.eq.s32.totalorder %s21, 1
      %p60 = por %p58, %p59
      %p62 = scmp.ne.s32.totalorder %s47, %s61
      %p63 = scmp.eq.s32.totalorder %s21, 0
      %p64 = por %p62, %p63
      %s66 = sadd.s32 %s65, 1
      %p69 = scmp.eq.s32.totalorder %s15, 1
      %p70 = scmp.ne.s32.totalorder %s65, %s67
      %p71 = scmp.eq.s32.totalorder %s15, 0
      %p72 = por %p70, %p71
      %p73 = scmp.ne.s32.totalorder %s65, %s67
      %p74 = scmp.eq.s32.totalorder %s20, 1
      %p75 = por %p73, %p74
      %p76 = scmp.ne.s32.totalorder %s67, %s68
      %p77 = scmp.eq.s32.totalorder %s20, 0
      %p78 = por %p76, %p77
      %p79 = scmp.ne.s32.totalorder %s67, %s68
      %p80 = scmp.eq.s32.totalorder %s21, 1
      %p81 = por %p79, %p80
      %p83 = scmp.ne.s32.totalorder %s68, %s82
      %p84 = scmp.eq.s32.totalorder %s21, 0
      %p85 = por %p83, %p84
      %s86 = ssub.s32 %s15, %s22
      %p87 = scmp.eq.s32.totalorder %s86, 0
      %s89 = sadd.s32 %s88, 1
      %s90 = scalar_select %p87, %s88, %s89
      %p93 = pneg %p87
      %p94 = scmp.eq.s32.totalorder %s15, 1
      %p95 = por %p93, %p94
      %p96 = scmp.ne.s32.totalorder %s88, %s91
      %p97 = scmp.eq.s32.totalorder %s15, 0
      %p98 = por %p96, %p97
      %p99 = scmp.ne.s32.totalorder %s88, %s91
      %p100 = scmp.eq.s32.totalorder %s20, 1
      %p101 = por %p99, %p100
      %p102 = scmp.ne.s32.totalorder %s91, %s92
      %p103 = scmp.eq.s32.totalorder %s20, 0
      %p104 = por %p102, %p103
      %p105 = scmp.ne.s32.totalorder %s91, %s92
      %p106 = scmp.eq.s32.totalorder %s21, 1
      %p107 = por %p105, %p106
      %p109 = scmp.ne.s32.totalorder %s92, %s108
      %p110 = scmp.eq.s32.totalorder %s21, 0
      %p111 = por %p109, %p110
      %s113 = sadd.s32 %s112, 1
      %p116 = scmp.eq.s32.totalorder %s15, 1
      %p117 = scmp.ne.s32.totalorder %s112, %s114
      %p118 = scmp.eq.s32.totalorder %s15, 0
      %p119 = por %p117, %p118
      %p120 = scmp.ne.s32.totalorder %s112, %s114
      %p121 = scmp.eq.s32.totalorder %s20, 1
      %p122 = por %p120, %p121
      %p123 = scmp.ne.s32.totalorder %s114, %s115
      %p124 = scmp.eq.s32.totalorder %s20, 0
      %p125 = por %p123, %p124
      %p126 = scmp.ne.s32.totalorder %s114, %s115
      %p127 = scmp.eq.s32.totalorder %s21, 1
      %p128 = por %p126, %p127
      %p130 = scmp.ne.s32.totalorder %s115, %s129
      %p131 = scmp.eq.s32.totalorder %s21, 0
      %p132 = por %p130, %p131
      %s133 = ssub.s32 %s15, %s22
      %p134 = scmp.eq.s32.totalorder %s133, 0
      %s136 = sadd.s32 %s135, 1
      %s137 = scalar_select %p134, %s135, %s136
      %p140 = pneg %p134
      %p141 = scmp.eq.s32.totalorder %s15, 1
      %p142 = por %p140, %p141
      %p143 = scmp.ne.s32.totalorder %s135, %s138
      %p144 = scmp.eq.s32.totalorder %s15, 0
      %p145 = por %p143, %p144
      %p146 = scmp.ne.s32.totalorder %s135, %s138
      %p147 = scmp.eq.s32.totalorder %s20, 1
      %p148 = por %p146, %p147
      %p149 = scmp.ne.s32.totalorder %s138, %s139
      %p150 = scmp.eq.s32.totalorder %s20, 0
      %p151 = por %p149, %p150
      %p152 = scmp.ne.s32.totalorder %s138, %s139
      %p153 = scmp.eq.s32.totalorder %s21, 1
      %p154 = por %p152, %p153
      %p156 = scmp.ne.s32.totalorder %s139, %s155
      %p157 = scmp.eq.s32.totalorder %s21, 0
      %p158 = por %p156, %p157
      %p159 = scmp.le.s32.totalorder 1, %s15
      %p160 = scmp.lt.s32.totalorder %s15, 3
      %p161 = pnand %p159, %p160
      %p162 = pneg %p161
      // Predicated region
      $region9: #{tpu_custom_call.1} parent=5 // pred_check
        _
      $region10: #{tpu_custom_call.1} parent=5 // pred_check_branch
        %164 = sbr.rel (%p161) target = $region12
      $region11: #{tpu_custom_call.1} parent=5 // pred_region
        %s165 = ssub.s32 %s15, 1
        // Predicated region
        $region13: #{tpu_custom_call.1} parent=11 // pred_check
          %p166 = pneg %p36
        $region14: #{tpu_custom_call.1} parent=11 // pred_check_branch
          %168 = sbr.rel (%p166) target = $region16
        $region15: #{tpu_custom_call.1} parent=11 // pred_region
          _
        $region16: #{tpu_custom_call.1} parent=11 // pred_fallthru
          _
        // Predicated region
        $region17: #{tpu_custom_call.1} parent=11 // pred_check
          %p169 = pneg %p57
        $region18: #{tpu_custom_call.1} parent=11 // pred_check_branch
          %171 = sbr.rel (%p169) target = $region20
        $region19: #{tpu_custom_call.1} parent=11 // pred_region
          %s173 = ssub.s32 64, 64
          %174 = vsyncadd [#allocation4], %s173
          %s176 = sshll.u32 [#allocation3], 4
          %s177 = int_to_ptr.vmem [resolvable:$true] %s176
          %179 = dma.hbm_to_vmem [thread:$0]  %s1, 64, %s177, [#allocation4]
        $region20: #{tpu_custom_call.1} parent=11 // pred_fallthru
          _
        // Predicated region
        $region21: #{tpu_custom_call.1} parent=11 // pred_check
          %p180 = pneg %p78
        $region22: #{tpu_custom_call.1} parent=11 // pred_check_branch
          %182 = sbr.rel (%p180) target = $region24
        $region23: #{tpu_custom_call.1} parent=11 // pred_region
          _
        $region24: #{tpu_custom_call.1} parent=11 // pred_fallthru
          _
        // Predicated region
        $region25: #{tpu_custom_call.1} parent=11 // pred_check
          %p183 = pneg %p125
        $region26: #{tpu_custom_call.1} parent=11 // pred_check_branch
          %185 = sbr.rel (%p183) target = $region28
        $region27: #{tpu_custom_call.1} parent=11 // pred_region
          _
        $region28: #{tpu_custom_call.1} parent=11 // pred_fallthru
          _
      $region12: #{tpu_custom_call.1} parent=5 // pred_fallthru
        _
      %p186 = scmp.lt.s32.totalorder %s15, 2
      // Predicated region
      $region29: #{tpu_custom_call.1} parent=5 // pred_check
        %p187 = pneg %p186
      $region30: #{tpu_custom_call.1} parent=5 // pred_check_branch
        %189 = sbr.rel (%p187) target = $region32
      $region31: #{tpu_custom_call.1} parent=5 // pred_region
        // Predicated region
        $region33: #{tpu_custom_call.1} parent=31 // pred_check
          %p190 = pneg %p98
        $region34: #{tpu_custom_call.1} parent=31 // pred_check_branch
          %192 = sbr.rel (%p190) target = $region36
        $region35: #{tpu_custom_call.1} parent=31 // pred_region
          %s193 = smul.u32 4, %s15
          %p194 = scmp.lt.s32.totalorder %s193, 7
          %s195 = scalar_select %p194, %s193, 7
          %s196 = smul.addr %s195, 8
          %s197 = scalar_lea.vmem %s3, %s196
          %s198 = smul.u32 4, %s15
        $region36: #{tpu_custom_call.1} parent=31 // pred_fallthru
          _
      $region32: #{tpu_custom_call.1} parent=5 // pred_fallthru
        _
      %p199 = scmp.le.s32.totalorder 1, %s15
      %p200 = scmp.lt.s32.totalorder %s15, 3
      %p201 = pnand %p199, %p200
      %p202 = pneg %p201
      // Predicated region
      $region37: #{tpu_custom_call.1} parent=5 // pred_check
        _
      $region38: #{tpu_custom_call.1} parent=5 // pred_check_branch
        %204 = sbr.rel (%p201) target = $region40
      $region39: #{tpu_custom_call.1} parent=5 // pred_region
        %s205 = ssub.s32 %s15, 1
        // Predicated region
        $region41: #{tpu_custom_call.1} parent=39 // pred_check
          %p206 = pneg %p57
        $region42: #{tpu_custom_call.1} parent=39 // pred_check_branch
          %208 = sbr.rel (%p206) target = $region44
        $region43: #{tpu_custom_call.1} parent=39 // pred_region
          %209 = dma.done [#allocation4], 64
        $region44: #{tpu_custom_call.1} parent=39 // pred_fallthru
          _
        %p210 = pneg %p36
        %p211 = pneg %p33
        %p212 = pneg %p57
        %p213 = pneg %p54
        %p214 = pneg %p78
        %p215 = pneg %p75
        %s216 = smul.u32 4, %s20
        %p217 = scmp.lt.s32.totalorder %s216, 7
        %s218 = scalar_select %p217, %s216, 7
        %s219 = smul.addr %s218, 8
        %s220 = scalar_lea.vmem %s3, %s219
        %p221 = pneg %p104
        %p222 = pneg %p101
        %p223 = pneg %p125
        %p224 = pneg %p122
        %p225 = pneg %p151
        %p226 = pneg %p148
        %s227 = sand.u32 %s138, 1
        %s228 = scalar_lea.sflag [#allocation5], %s227
        %s229 = sand.u32 %s138, 1
        %s230 = smul.addr %s229, 256
        %s231 = scalar_lea.vmem [#allocation6], %s230
        %s232 = smul.u32 4, %s20
        %p233 = scmp.lt.s32.totalorder %s232, 7
        %s234 = scalar_select %p233, %s232, 7
        %s235 = smul.addr %s234, 8
        %s236 = scalar_lea.vmem %s3, %s235
        %s237 = smul.u32 4, %s20
        %s238 = smul.u32 4, %s20
        %v239 = vld [vmem:[#allocation3] sm:$0xf]
        %v240 = vld [vmem:[%s0] sm:$0xff]
        %v241 = vld [vmem:[%s0 + $0x8] sm:$0xff]
        %v242 = vld [vmem:[%s0 + $0x10] sm:$0xff]
        %v243 = vld [vmem:[%s0 + $0x18] sm:$0xff]
        %v244 = vld [vmem:[%s2] sm:$0xf]
        %246 = vset.pattern.permute.xlu0 0
        %247 = vperm.xlu0 %246, %v244
        %v248 = vpop.permute.xlu0 %247
        %vm250 = vcmask 261120
        %v252 = vsel %vm250, %v239, 0
        %254 = vmatprep.subr.mxu0 0.0
        %255 = vmatpush1.msra.mxu0 0.0
        %256 = vmatprep.subr.mxu0 0.0
        %257 = vmatpush1.msra.mxu0 0.0
        %258 = vmatprep.subr.mxu0 0.0
        %259 = vmatpush1.msra.mxu0 0.0
        %260 = vmatprep.subr.mxu0 0.0
        %261 = vmatpush1.msra.mxu0 0.0
        %262 = vmatprep.subr.mxu0 0.0
        %263 = vmatpush1.msra.mxu0 0.0
        %264 = vmatprep.subr.mxu0 0.0
        %265 = vmatpush1.msra.mxu0 0.0
        %266 = vmatprep.subr.mxu0 0.0
        %267 = vmatpush1.msra.mxu0 0.0
        %268 = vmatprep.subr.mxu0 0.0
        %269 = vmatpush1.msra.mxu0 0.0
        %270 = vmatprep.subr.mxu0 0.0
        %271 = vmatpush1.msra.mxu0 0.0
        %272 = vmatprep.subr.mxu0 0.0
        %273 = vmatpush1.msra.mxu0 0.0
        %274 = vmatprep.subr.mxu0 0.0
        %275 = vmatpush1.msra.mxu0 0.0
        %276 = vmatprep.subr.mxu0 0.0
        %277 = vmatpush1.msra.mxu0 0.0
        %278 = vmatprep.subr.mxu0 0.0
        %279 = vmatpush1.msra.mxu0 %v243
        %280 = vmatprep.subr.mxu0 0.0
        %281 = vmatpush1.msra.mxu0 %v242
        %282 = vmatprep.subr.mxu0 0.0
        %283 = vmatpush1.msra.mxu0 %v241
        %284 = vmatprep.subr.mxu0 0.0
        %285 = vmatpush1.msra.mxu0 %v240
        %286 = vmatprep.subr.mxu0 0.0
        %287 = vmatpush2.msra.mxu0 0.0
        %288 = vmatprep.subr.mxu0 0.0
        %289 = vmatpush2.msra.mxu0 0.0
        %290 = vmatprep.subr.mxu0 0.0
        %291 = vmatpush2.msra.mxu0 0.0
        %292 = vmatprep.subr.mxu0 0.0
        %293 = vmatpush2.msra.mxu0 0.0
        %294 = vmatprep.subr.mxu0 0.0
        %295 = vmatpush2.msra.mxu0 0.0
        %296 = vmatprep.subr.mxu0 0.0
        %297 = vmatpush2.msra.mxu0 0.0
        %298 = vmatprep.subr.mxu0 0.0
        %299 = vmatpush2.msra.mxu0 0.0
        %300 = vmatprep.subr.mxu0 0.0
        %301 = vmatpush2.msra.mxu0 0.0
        %302 = vmatprep.subr.mxu0 0.0
        %303 = vmatpush2.msra.mxu0 0.0
        %304 = vmatprep.subr.mxu0 0.0
        %305 = vmatpush2.msra.mxu0 0.0
        %306 = vmatprep.subr.mxu0 0.0
        %307 = vmatpush2.msra.mxu0 0.0
        %308 = vmatprep.subr.mxu0 0.0
        %309 = vmatpush2.msra.mxu0 0.0
        %310 = vmatprep.subr.mxu0 0.0
        %311 = vmatpush2.msra.mxu0 0.0
        %312 = vmatprep.subr.mxu0 0.0
        %313 = vmatpush2.msra.mxu0 0.0
        %314 = vmatprep.subr.mxu0 0.0
        %315 = vmatpush2.msra.mxu0 0.0
        %316 = vmatprep.subr.mxu0 0.0
        %317 = vmatpush2.msra.mxu0 0.0
        %318 = vmatprep.mubr.f32.mxu0 0.0
        %319 = vmatmul.mubr.f32.gmra.mxu0 %v252
        %v320 = vpop.f32.mrf.mxu0
        %v321 = vadd.f32 %v248, %v320
        %v322 = vpop.f32.mrf.mxu0
        %323 = vdwg.mxu0
        %v326 = vunpack.c.l.s4 1966171168
        %v327 = vunpack.c.0.s8 %v326
        %v328 = vlaneseq
        %v329 = vshrl.u32 %v328, 7
        %v330 = vsub.s32 %v327, %v329
        %v331 = vrot.slane %v321, %v330
        %v332 = vcombine.high %v331, %v331
        %v334 = vunpack.c.l.s4 1966171168
        %v335 = vunpack.c.0.s8 %v334
        %v336 = vlaneseq
        %v337 = vshrl.u32 %v336, 7
        %v338 = vsub.s32 %v335, %v337
        %v339 = vrot.slane %v331, %v338
        %v341 = vunpack.c.l.s4 1966171168
        %v342 = vunpack.c.0.s8 %v341
        %v343 = vlaneseq
        %v344 = vshrl.u32 %v343, 7
        %v345 = vsub.s32 %v342, %v344
        %v346 = vrot.slane %v332, %v345
        %v347 = vcombine.high %v339, %v339
        %v348 = vcombine.high %v346, %v346
        %vm353 = vcmask 57344
        %354 = vst.msk [vmem:[#allocation2] sm:$0x1] %vm353, %v339
        %355 = vst.msk [vmem:[#allocation2 + $0x8] sm:$0x1] %vm353, %v346
        %356 = vst.msk [vmem:[#allocation2 + $0x10] sm:$0x1] %vm353, %v347
        %357 = vst.msk [vmem:[#allocation2 + $0x18] sm:$0x1] %vm353, %v348
        %v358 = vlaneseq
        %v359 = vshrl.u32 %v358, 7
        %v360 = vsub.s32 0, %v359
        %v361 = vrot.slane %v339, %v360
        %v362 = vlaneseq
        %v363 = vshrl.u32 %v362, 7
        %v364 = vsub.s32 0, %v363
        %v365 = vrot.slane %v346, %v364
        %v366 = vlaneseq
        %v367 = vshrl.u32 %v366, 7
        %v368 = vsub.s32 0, %v367
        %v369 = vrot.slane %v347, %v368
        %v370 = vlaneseq
        %v371 = vshrl.u32 %v370, 7
        %v372 = vsub.s32 0, %v371
        %v373 = vrot.slane %v348, %v372
        %374 = vrot.lane.b32.xlu0 %v361, 120
        %v375 = vpop.permute.xlu0 %374
        %376 = vrot.lane.b32.xlu0 %v365, 120
        %v377 = vpop.permute.xlu0 %376
        %378 = vrot.lane.b32.xlu0 %v369, 120
        %v379 = vpop.permute.xlu0 %378
        %380 = vrot.lane.b32.xlu0 %v373, 120
        %v381 = vpop.permute.xlu0 %380
        %386 = vst.msk [vmem:[#allocation2 + $0x1] sm:$0x1] %vm353, %v375
        %387 = vst.msk [vmem:[#allocation2 + $0x9] sm:$0x1] %vm353, %v377
        %388 = vst.msk [vmem:[#allocation2 + $0x11] sm:$0x1] %vm353, %v379
        %389 = vst.msk [vmem:[#allocation2 + $0x19] sm:$0x1] %vm353, %v381
        %390 = vrot.lane.b32.xlu0 %v361, 112
        %v391 = vpop.permute.xlu0 %390
        %392 = vrot.lane.b32.xlu0 %v365, 112
        %v393 = vpop.permute.xlu0 %392
        %394 = vrot.lane.b32.xlu0 %v369, 112
        %v395 = vpop.permute.xlu0 %394
        %396 = vrot.lane.b32.xlu0 %v373, 112
        %v397 = vpop.permute.xlu0 %396
        %402 = vst.msk [vmem:[#allocation2 + $0x2] sm:$0x1] %vm353, %v391
        %403 = vst.msk [vmem:[#allocation2 + $0xa] sm:$0x1] %vm353, %v393
        %404 = vst.msk [vmem:[#allocation2 + $0x12] sm:$0x1] %vm353, %v395
        %405 = vst.msk [vmem:[#allocation2 + $0x1a] sm:$0x1] %vm353, %v397
        %406 = vrot.lane.b32.xlu0 %v361, 104
        %v407 = vpop.permute.xlu0 %406
        %408 = vrot.lane.b32.xlu0 %v365, 104
        %v409 = vpop.permute.xlu0 %408
        %410 = vrot.lane.b32.xlu0 %v369, 104
        %v411 = vpop.permute.xlu0 %410
        %412 = vrot.lane.b32.xlu0 %v373, 104
        %v413 = vpop.permute.xlu0 %412
        %418 = vst.msk [vmem:[#allocation2 + $0x3] sm:$0x1] %vm353, %v407
        %419 = vst.msk [vmem:[#allocation2 + $0xb] sm:$0x1] %vm353, %v409
        %420 = vst.msk [vmem:[#allocation2 + $0x13] sm:$0x1] %vm353, %v411
        %421 = vst.msk [vmem:[#allocation2 + $0x1b] sm:$0x1] %vm353, %v413
        %422 = vrot.lane.b32.xlu0 %v361, 96
        %v423 = vpop.permute.xlu0 %422
        %424 = vrot.lane.b32.xlu0 %v365, 96
        %v425 = vpop.permute.xlu0 %424
        %426 = vrot.lane.b32.xlu0 %v369, 96
        %v427 = vpop.permute.xlu0 %426
        %428 = vrot.lane.b32.xlu0 %v373, 96
        %v429 = vpop.permute.xlu0 %428
        %434 = vst.msk [vmem:[#allocation2 + $0x4] sm:$0x1] %vm353, %v423
        %435 = vst.msk [vmem:[#allocation2 + $0xc] sm:$0x1] %vm353, %v425
        %436 = vst.msk [vmem:[#allocation2 + $0x14] sm:$0x1] %vm353, %v427
        %437 = vst.msk [vmem:[#allocation2 + $0x1c] sm:$0x1] %vm353, %v429
        %438 = vrot.lane.b32.xlu0 %v361, 88
        %v439 = vpop.permute.xlu0 %438
        %440 = vrot.lane.b32.xlu0 %v365, 88
        %v441 = vpop.permute.xlu0 %440
        %442 = vrot.lane.b32.xlu0 %v369, 88
        %v443 = vpop.permute.xlu0 %442
        %444 = vrot.lane.b32.xlu0 %v373, 88
        %v445 = vpop.permute.xlu0 %444
        %450 = vst.msk [vmem:[#allocation2 + $0x5] sm:$0x1] %vm353, %v439
        %451 = vst.msk [vmem:[#allocation2 + $0xd] sm:$0x1] %vm353, %v441
        %452 = vst.msk [vmem:[#allocation2 + $0x15] sm:$0x1] %vm353, %v443
        %453 = vst.msk [vmem:[#allocation2 + $0x1d] sm:$0x1] %vm353, %v445
        %454 = vrot.lane.b32.xlu0 %v361, 80
        %v455 = vpop.permute.xlu0 %454
        %456 = vrot.lane.b32.xlu0 %v365, 80
        %v457 = vpop.permute.xlu0 %456
        %458 = vrot.lane.b32.xlu0 %v369, 80
        %v459 = vpop.permute.xlu0 %458
        %460 = vrot.lane.b32.xlu0 %v373, 80
        %v461 = vpop.permute.xlu0 %460
        %466 = vst.msk [vmem:[#allocation2 + $0x6] sm:$0x1] %vm353, %v455
        %467 = vst.msk [vmem:[#allocation2 + $0xe] sm:$0x1] %vm353, %v457
        %468 = vst.msk [vmem:[#allocation2 + $0x16] sm:$0x1] %vm353, %v459
        %469 = vst.msk [vmem:[#allocation2 + $0x1e] sm:$0x1] %vm353, %v461
        %470 = vrot.lane.b32.xlu0 %v361, 72
        %v471 = vpop.permute.xlu0 %470
        %472 = vrot.lane.b32.xlu0 %v365, 72
        %v473 = vpop.permute.xlu0 %472
        %474 = vrot.lane.b32.xlu0 %v369, 72
        %v475 = vpop.permute.xlu0 %474
        %476 = vrot.lane.b32.xlu0 %v373, 72
        %v477 = vpop.permute.xlu0 %476
        %482 = vst.msk [vmem:[#allocation2 + $0x7] sm:$0x1] %vm353, %v471
        %483 = vst.msk [vmem:[#allocation2 + $0xf] sm:$0x1] %vm353, %v473
        %484 = vst.msk [vmem:[#allocation2 + $0x17] sm:$0x1] %vm353, %v475
        %485 = vst.msk [vmem:[#allocation2 + $0x1f] sm:$0x1] %vm353, %v477
        %v486 = vld [vmem:[#allocation3] sm:$0xf]
        %s487 = scalar_lea.vmem %s0, 32
        %v488 = vld [vmem:[%s487] sm:$0xff]
        %v489 = vld [vmem:[%s487 + $0x8] sm:$0xff]
        %v490 = vld [vmem:[%s487 + $0x10] sm:$0xff]
        %v491 = vld [vmem:[%s487 + $0x18] sm:$0xff]
        %v492 = vld [vmem:[%s2] sm:$0xf]
        %494 = vset.pattern.permute.xlu0 0
        %495 = vperm.xlu0 %494, %v492
        %v496 = vpop.permute.xlu0 %495
        %v499 = vsel %vm250, %v486, 0
        %501 = vmatprep.subr.mxu0 0.0
        %502 = vmatpush1.msra.mxu0 0.0
        %503 = vmatprep.subr.mxu0 0.0
        %504 = vmatpush1.msra.mxu0 0.0
        %505 = vmatprep.subr.mxu0 0.0
        %506 = vmatpush1.msra.mxu0 0.0
        %507 = vmatprep.subr.mxu0 0.0
        %508 = vmatpush1.msra.mxu0 0.0
        %509 = vmatprep.subr.mxu0 0.0
        %510 = vmatpush1.msra.mxu0 0.0
        %511 = vmatprep.subr.mxu0 0.0
        %512 = vmatpush1.msra.mxu0 0.0
        %513 = vmatprep.subr.mxu0 0.0
        %514 = vmatpush1.msra.mxu0 0.0
        %515 = vmatprep.subr.mxu0 0.0
        %516 = vmatpush1.msra.mxu0 0.0
        %517 = vmatprep.subr.mxu0 0.0
        %518 = vmatpush1.msra.mxu0 0.0
        %519 = vmatprep.subr.mxu0 0.0
        %520 = vmatpush1.msra.mxu0 0.0
        %521 = vmatprep.subr.mxu0 0.0
        %522 = vmatpush1.msra.mxu0 0.0
        %523 = vmatprep.subr.mxu0 0.0
        %524 = vmatpush1.msra.mxu0 0.0
        %525 = vmatprep.subr.mxu0 0.0
        %526 = vmatpush1.msra.mxu0 %v491
        %527 = vmatprep.subr.mxu0 0.0
        %528 = vmatpush1.msra.mxu0 %v490
        %529 = vmatprep.subr.mxu0 0.0
        %530 = vmatpush1.msra.mxu0 %v489
        %531 = vmatprep.subr.mxu0 0.0
        %532 = vmatpush1.msra.mxu0 %v488
        %533 = vmatprep.subr.mxu0 0.0
        %534 = vmatpush2.msra.mxu0 0.0
        %535 = vmatprep.subr.mxu0 0.0
        %536 = vmatpush2.msra.mxu0 0.0
        %537 = vmatprep.subr.mxu0 0.0
        %538 = vmatpush2.msra.mxu0 0.0
        %539 = vmatprep.subr.mxu0 0.0
        %540 = vmatpush2.msra.mxu0 0.0
        %541 = vmatprep.subr.mxu0 0.0
        %542 = vmatpush2.msra.mxu0 0.0
        %543 = vmatprep.subr.mxu0 0.0
        %544 = vmatpush2.msra.mxu0 0.0
        %545 = vmatprep.subr.mxu0 0.0
        %546 = vmatpush2.msra.mxu0 0.0
        %547 = vmatprep.subr.mxu0 0.0
        %548 = vmatpush2.msra.mxu0 0.0
        %549 = vmatprep.subr.mxu0 0.0
        %550 = vmatpush2.msra.mxu0 0.0
        %551 = vmatprep.subr.mxu0 0.0
        %552 = vmatpush2.msra.mxu0 0.0
        %553 = vmatprep.subr.mxu0 0.0
        %554 = vmatpush2.msra.mxu0 0.0
        %555 = vmatprep.subr.mxu0 0.0
        %556 = vmatpush2.msra.mxu0 0.0
        %557 = vmatprep.subr.mxu0 0.0
        %558 = vmatpush2.msra.mxu0 0.0
        %559 = vmatprep.subr.mxu0 0.0
        %560 = vmatpush2.msra.mxu0 0.0
        %561 = vmatprep.subr.mxu0 0.0
        %562 = vmatpush2.msra.mxu0 0.0
        %563 = vmatprep.subr.mxu0 0.0
        %564 = vmatpush2.msra.mxu0 0.0
        %565 = vmatprep.mubr.f32.mxu0 0.0
        %566 = vmatmul.mubr.f32.gmra.mxu0 %v499
        %v567 = vpop.f32.mrf.mxu0
        %v568 = vadd.f32 %v496, %v567
        %v569 = vpop.f32.mrf.mxu0
        %570 = vdwg.mxu0
        %v573 = vunpack.c.l.s4 1966171168
        %v574 = vunpack.c.0.s8 %v573
        %v575 = vlaneseq
        %v576 = vshrl.u32 %v575, 7
        %v577 = vsub.s32 %v574, %v576
        %v578 = vrot.slane %v568, %v577
        %v579 = vcombine.high %v578, %v578
        %v581 = vunpack.c.l.s4 1966171168
        %v582 = vunpack.c.0.s8 %v581
        %v583 = vlaneseq
        %v584 = vshrl.u32 %v583, 7
        %v585 = vsub.s32 %v582, %v584
        %v586 = vrot.slane %v578, %v585
        %v588 = vunpack.c.l.s4 1966171168
        %v589 = vunpack.c.0.s8 %v588
        %v590 = vlaneseq
        %v591 = vshrl.u32 %v590, 7
        %v592 = vsub.s32 %v589, %v591
        %v593 = vrot.slane %v579, %v592
        %v594 = vcombine.high %v586, %v586
        %v595 = vcombine.high %v593, %v593
        %s600 = scalar_lea.vmem [#allocation2], 32
        %601 = vst.msk [vmem:[%s600] sm:$0x1] %vm353, %v586
        %602 = vst.msk [vmem:[%s600 + $0x8] sm:$0x1] %vm353, %v593
        %603 = vst.msk [vmem:[%s600 + $0x10] sm:$0x1] %vm353, %v594
        %604 = vst.msk [vmem:[%s600 + $0x18] sm:$0x1] %vm353, %v595
        %v605 = vlaneseq
        %v606 = vshrl.u32 %v605, 7
        %v607 = vsub.s32 0, %v606
        %v608 = vrot.slane %v586, %v607
        %v609 = vlaneseq
        %v610 = vshrl.u32 %v609, 7
        %v611 = vsub.s32 0, %v610
        %v612 = vrot.slane %v593, %v611
        %v613 = vlaneseq
        %v614 = vshrl.u32 %v613, 7
        %v615 = vsub.s32 0, %v614
        %v616 = vrot.slane %v594, %v615
        %v617 = vlaneseq
        %v618 = vshrl.u32 %v617, 7
        %v619 = vsub.s32 0, %v618
        %v620 = vrot.slane %v595, %v619
        %621 = vrot.lane.b32.xlu0 %v608, 120
        %v622 = vpop.permute.xlu0 %621
        %623 = vrot.lane.b32.xlu0 %v612, 120
        %v624 = vpop.permute.xlu0 %623
        %625 = vrot.lane.b32.xlu0 %v616, 120
        %v626 = vpop.permute.xlu0 %625
        %627 = vrot.lane.b32.xlu0 %v620, 120
        %v628 = vpop.permute.xlu0 %627
        %633 = vst.msk [vmem:[%s600 + $0x1] sm:$0x1] %vm353, %v622
        %634 = vst.msk [vmem:[%s600 + $0x9] sm:$0x1] %vm353, %v624
        %635 = vst.msk [vmem:[%s600 + $0x11] sm:$0x1] %vm353, %v626
        %636 = vst.msk [vmem:[%s600 + $0x19] sm:$0x1] %vm353, %v628
        %637 = vrot.lane.b32.xlu0 %v608, 112
        %v638 = vpop.permute.xlu0 %637
        %639 = vrot.lane.b32.xlu0 %v612, 112
        %v640 = vpop.permute.xlu0 %639
        %641 = vrot.lane.b32.xlu0 %v616, 112
        %v642 = vpop.permute.xlu0 %641
        %643 = vrot.lane.b32.xlu0 %v620, 112
        %v644 = vpop.permute.xlu0 %643
        %649 = vst.msk [vmem:[%s600 + $0x2] sm:$0x1] %vm353, %v638
        %650 = vst.msk [vmem:[%s600 + $0xa] sm:$0x1] %vm353, %v640
        %651 = vst.msk [vmem:[%s600 + $0x12] sm:$0x1] %vm353, %v642
        %652 = vst.msk [vmem:[%s600 + $0x1a] sm:$0x1] %vm353, %v644
        %653 = vrot.lane.b32.xlu0 %v608, 104
        %v654 = vpop.permute.xlu0 %653
        %655 = vrot.lane.b32.xlu0 %v612, 104
        %v656 = vpop.permute.xlu0 %655
        %657 = vrot.lane.b32.xlu0 %v616, 104
        %v658 = vpop.permute.xlu0 %657
        %659 = vrot.lane.b32.xlu0 %v620, 104
        %v660 = vpop.permute.xlu0 %659
        %665 = vst.msk [vmem:[%s600 + $0x3] sm:$0x1] %vm353, %v654
        %666 = vst.msk [vmem:[%s600 + $0xb] sm:$0x1] %vm353, %v656
        %667 = vst.msk [vmem:[%s600 + $0x13] sm:$0x1] %vm353, %v658
        %668 = vst.msk [vmem:[%s600 + $0x1b] sm:$0x1] %vm353, %v660
        %669 = vrot.lane.b32.xlu0 %v608, 96
        %v670 = vpop.permute.xlu0 %669
        %671 = vrot.lane.b32.xlu0 %v612, 96
        %v672 = vpop.permute.xlu0 %671
        %673 = vrot.lane.b32.xlu0 %v616, 96
        %v674 = vpop.permute.xlu0 %673
        %675 = vrot.lane.b32.xlu0 %v620, 96
        %v676 = vpop.permute.xlu0 %675
        %681 = vst.msk [vmem:[%s600 + $0x4] sm:$0x1] %vm353, %v670
        %682 = vst.msk [vmem:[%s600 + $0xc] sm:$0x1] %vm353, %v672
        %683 = vst.msk [vmem:[%s600 + $0x14] sm:$0x1] %vm353, %v674
        %684 = vst.msk [vmem:[%s600 + $0x1c] sm:$0x1] %vm353, %v676
        %685 = vrot.lane.b32.xlu0 %v608, 88
        %v686 = vpop.permute.xlu0 %685
        %687 = vrot.lane.b32.xlu0 %v612, 88
        %v688 = vpop.permute.xlu0 %687
        %689 = vrot.lane.b32.xlu0 %v616, 88
        %v690 = vpop.permute.xlu0 %689
        %691 = vrot.lane.b32.xlu0 %v620, 88
        %v692 = vpop.permute.xlu0 %691
        %697 = vst.msk [vmem:[%s600 + $0x5] sm:$0x1] %vm353, %v686
        %698 = vst.msk [vmem:[%s600 + $0xd] sm:$0x1] %vm353, %v688
        %699 = vst.msk [vmem:[%s600 + $0x15] sm:$0x1] %vm353, %v690
        %700 = vst.msk [vmem:[%s600 + $0x1d] sm:$0x1] %vm353, %v692
        %701 = vrot.lane.b32.xlu0 %v608, 80
        %v702 = vpop.permute.xlu0 %701
        %703 = vrot.lane.b32.xlu0 %v612, 80
        %v704 = vpop.permute.xlu0 %703
        %705 = vrot.lane.b32.xlu0 %v616, 80
        %v706 = vpop.permute.xlu0 %705
        %707 = vrot.lane.b32.xlu0 %v620, 80
        %v708 = vpop.permute.xlu0 %707
        %713 = vst.msk [vmem:[%s600 + $0x6] sm:$0x1] %vm353, %v702
        %714 = vst.msk [vmem:[%s600 + $0xe] sm:$0x1] %vm353, %v704
        %715 = vst.msk [vmem:[%s600 + $0x16] sm:$0x1] %vm353, %v706
        %716 = vst.msk [vmem:[%s600 + $0x1e] sm:$0x1] %vm353, %v708
        %717 = vrot.lane.b32.xlu0 %v608, 72
        %v718 = vpop.permute.xlu0 %717
        %719 = vrot.lane.b32.xlu0 %v612, 72
        %v720 = vpop.permute.xlu0 %719
        %721 = vrot.lane.b32.xlu0 %v616, 72
        %v722 = vpop.permute.xlu0 %721
        %723 = vrot.lane.b32.xlu0 %v620, 72
        %v724 = vpop.permute.xlu0 %723
        %729 = vst.msk [vmem:[%s600 + $0x7] sm:$0x1] %vm353, %v718
        %730 = vst.msk [vmem:[%s600 + $0xf] sm:$0x1] %vm353, %v720
        %731 = vst.msk [vmem:[%s600 + $0x17] sm:$0x1] %vm353, %v722
        %732 = vst.msk [vmem:[%s600 + $0x1f] sm:$0x1] %vm353, %v724
        %v733 = vld [vmem:[#allocation2] sm:$0xff]
        %v734 = vld [vmem:[#allocation2 + $0x8] sm:$0xff]
        %v735 = vld [vmem:[#allocation2 + $0x10] sm:$0xff]
        %v736 = vld [vmem:[#allocation2 + $0x18] sm:$0xff]
        %v737 = vld [vmem:[#allocation2 + $0x20] sm:$0xff]
        %v738 = vld [vmem:[#allocation2 + $0x28] sm:$0xff]
        %v739 = vld [vmem:[#allocation2 + $0x30] sm:$0xff]
        %v740 = vld [vmem:[#allocation2 + $0x38] sm:$0xff]
        %v741 = vld [vmem:[%s236] sm:$0xff]
        %v742 = vld [vmem:[%s236 + $0x8] sm:$0xff]
        %v743 = vld [vmem:[%s236 + $0x10] sm:$0xff]
        %v744 = vld [vmem:[%s236 + $0x18] sm:$0xff]
        %vm745 = vcmask 64512
        %v747 = vsel %vm745, %v741, 0
        %v750 = vsel %vm745, %v742, 0
        %v753 = vsel %vm745, %v743, 0
        %v756 = vsel %vm745, %v744, 0
        %758 = vmatprep.subr.mxu0 0.0
        %759 = vmatpush1.msra.mxu0 0.0
        %760 = vmatprep.subr.mxu0 0.0
        %761 = vmatpush1.msra.mxu0 0.0
        %762 = vmatprep.subr.mxu0 0.0
        %763 = vmatpush1.msra.mxu0 0.0
        %764 = vmatprep.subr.mxu0 0.0
        %765 = vmatpush1.msra.mxu0 0.0
        %766 = vmatprep.subr.mxu0 0.0
        %767 = vmatpush1.msra.mxu0 0.0
        %768 = vmatprep.subr.mxu0 0.0
        %769 = vmatpush1.msra.mxu0 0.0
        %770 = vmatprep.subr.mxu0 0.0
        %771 = vmatpush1.msra.mxu0 0.0
        %772 = vmatprep.subr.mxu0 0.0
        %773 = vmatpush1.msra.mxu0 0.0
        %774 = vmatprep.subr.mxu0 0.0
        %775 = vmatpush1.msra.mxu0 0.0
        %776 = vmatprep.subr.mxu0 0.0
        %777 = vmatpush1.msra.mxu0 0.0
        %778 = vmatprep.subr.mxu0 0.0
        %779 = vmatpush1.msra.mxu0 0.0
        %780 = vmatprep.subr.mxu0 0.0
        %781 = vmatpush1.msra.mxu0 0.0
        %782 = vmatprep.subr.mxu0 0.0
        %783 = vmatpush1.msra.mxu0 0.0
        %784 = vmatprep.subr.mxu0 0.0
        %785 = vmatpush1.msra.mxu0 0.0
        %786 = vmatprep.subr.mxu0 0.0
        %787 = vmatpush1.msra.mxu0 0.0
        %788 = vmatprep.subr.mxu0 0.0
        %789 = vmatpush1.msra.mxu0 %v733
        %790 = vmatprep.subr.mxu0 0.0
        %791 = vmatpush2.msra.mxu0 0.0
        %792 = vmatprep.subr.mxu0 0.0
        %793 = vmatpush2.msra.mxu0 0.0
        %794 = vmatprep.subr.mxu0 0.0
        %795 = vmatpush2.msra.mxu0 0.0
        %796 = vmatprep.subr.mxu0 0.0
        %797 = vmatpush2.msra.mxu0 0.0
        %798 = vmatprep.subr.mxu0 0.0
        %799 = vmatpush2.msra.mxu0 0.0
        %800 = vmatprep.subr.mxu0 0.0
        %801 = vmatpush2.msra.mxu0 0.0
        %802 = vmatprep.subr.mxu0 0.0
        %803 = vmatpush2.msra.mxu0 0.0
        %804 = vmatprep.subr.mxu0 0.0
        %805 = vmatpush2.msra.mxu0 0.0
        %806 = vmatprep.subr.mxu0 0.0
        %807 = vmatpush2.msra.mxu0 0.0
        %808 = vmatprep.subr.mxu0 0.0
        %809 = vmatpush2.msra.mxu0 0.0
        %810 = vmatprep.subr.mxu0 0.0
        %811 = vmatpush2.msra.mxu0 0.0
        %812 = vmatprep.subr.mxu0 0.0
        %813 = vmatpush2.msra.mxu0 0.0
        %814 = vmatprep.subr.mxu0 0.0
        %815 = vmatpush2.msra.mxu0 0.0
        %816 = vmatprep.subr.mxu0 0.0
        %817 = vmatpush2.msra.mxu0 0.0
        %818 = vmatprep.subr.mxu0 0.0
        %819 = vmatpush2.msra.mxu0 0.0
        %820 = vmatprep.subr.mxu0 0.0
        %821 = vmatpush2.msra.mxu0 0.0
        %822 = vmatprep.mubr.f32.mxu0 0.0
        %823 = vmatmul.mubr.f32.gmra.mxu0 %v747
        %v824 = vpop.f32.mrf.mxu0
        %v825 = vadd.f32 0.0, %v824
        %v826 = vpop.f32.mrf.mxu0
        %827 = vmatprep.mubr.f32.mxu0 0.0
        %828 = vmatmul.mubr.f32.gmra.mxu0 %v750
        %v829 = vpop.f32.mrf.mxu0
        %v830 = vadd.f32 0.0, %v829
        %v831 = vpop.f32.mrf.mxu0
        %832 = vmatprep.mubr.f32.mxu0 0.0
        %833 = vmatmul.mubr.f32.gmra.mxu0 %v753
        %v834 = vpop.f32.mrf.mxu0
        %v835 = vadd.f32 0.0, %v834
        %v836 = vpop.f32.mrf.mxu0
        %837 = vmatprep.mubr.f32.mxu0 0.0
        %838 = vmatmul.mubr.f32.gmra.mxu0 %v756
        %v839 = vpop.f32.mrf.mxu0
        %v840 = vadd.f32 0.0, %v839
        %v841 = vpop.f32.mrf.mxu0
        %842 = vdwg.mxu0
        %843 = vmatprep.subr.mxu0 0.0
        %844 = vmatpush1.msra.mxu0 0.0
        %845 = vmatprep.subr.mxu0 0.0
        %846 = vmatpush1.msra.mxu0 0.0
        %847 = vmatprep.subr.mxu0 0.0
        %848 = vmatpush1.msra.mxu0 0.0
        %849 = vmatprep.subr.mxu0 0.0
        %850 = vmatpush1.msra.mxu0 0.0
        %851 = vmatprep.subr.mxu0 0.0
        %852 = vmatpush1.msra.mxu0 0.0
        %853 = vmatprep.subr.mxu0 0.0
        %854 = vmatpush1.msra.mxu0 0.0
        %855 = vmatprep.subr.mxu0 0.0
        %856 = vmatpush1.msra.mxu0 0.0
        %857 = vmatprep.subr.mxu0 0.0
        %858 = vmatpush1.msra.mxu0 0.0
        %859 = vmatprep.subr.mxu0 0.0
        %860 = vmatpush1.msra.mxu0 0.0
        %861 = vmatprep.subr.mxu0 0.0
        %862 = vmatpush1.msra.mxu0 0.0
        %863 = vmatprep.subr.mxu0 0.0
        %864 = vmatpush1.msra.mxu0 0.0
        %865 = vmatprep.subr.mxu0 0.0
        %866 = vmatpush1.msra.mxu0 0.0
        %867 = vmatprep.subr.mxu0 0.0
        %868 = vmatpush1.msra.mxu0 0.0
        %869 = vmatprep.subr.mxu0 0.0
        %870 = vmatpush1.msra.mxu0 0.0
        %871 = vmatprep.subr.mxu0 0.0
        %872 = vmatpush1.msra.mxu0 0.0
        %873 = vmatprep.subr.mxu0 0.0
        %874 = vmatpush1.msra.mxu0 %v734
        %875 = vmatprep.subr.mxu0 0.0
        %876 = vmatpush2.msra.mxu0 0.0
        %877 = vmatprep.subr.mxu0 0.0
        %878 = vmatpush2.msra.mxu0 0.0
        %879 = vmatprep.subr.mxu0 0.0
        %880 = vmatpush2.msra.mxu0 0.0
        %881 = vmatprep.subr.mxu0 0.0
        %882 = vmatpush2.msra.mxu0 0.0
        %883 = vmatprep.subr.mxu0 0.0
        %884 = vmatpush2.msra.mxu0 0.0
        %885 = vmatprep.subr.mxu0 0.0
        %886 = vmatpush2.msra.mxu0 0.0
        %887 = vmatprep.subr.mxu0 0.0
        %888 = vmatpush2.msra.mxu0 0.0
        %889 = vmatprep.subr.mxu0 0.0
        %890 = vmatpush2.msra.mxu0 0.0
        %891 = vmatprep.subr.mxu0 0.0
        %892 = vmatpush2.msra.mxu0 0.0
        %893 = vmatprep.subr.mxu0 0.0
        %894 = vmatpush2.msra.mxu0 0.0
        %895 = vmatprep.subr.mxu0 0.0
        %896 = vmatpush2.msra.mxu0 0.0
        %897 = vmatprep.subr.mxu0 0.0
        %898 = vmatpush2.msra.mxu0 0.0
        %899 = vmatprep.subr.mxu0 0.0
        %900 = vmatpush2.msra.mxu0 0.0
        %901 = vmatprep.subr.mxu0 0.0
        %902 = vmatpush2.msra.mxu0 0.0
        %903 = vmatprep.subr.mxu0 0.0
        %904 = vmatpush2.msra.mxu0 0.0
        %905 = vmatprep.subr.mxu0 0.0
        %906 = vmatpush2.msra.mxu0 0.0
        %907 = vmatprep.mubr.f32.mxu0 0.0
        %908 = vmatmul.mubr.f32.gmra.mxu0 %v747
        %v909 = vpop.f32.mrf.mxu0
        %v910 = vadd.f32 0.0, %v909
        %v911 = vpop.f32.mrf.mxu0
        %912 = vmatprep.mubr.f32.mxu0 0.0
        %913 = vmatmul.mubr.f32.gmra.mxu0 %v750
        %v914 = vpop.f32.mrf.mxu0
        %v915 = vadd.f32 0.0, %v914
        %v916 = vpop.f32.mrf.mxu0
        %917 = vmatprep.mubr.f32.mxu0 0.0
        %918 = vmatmul.mubr.f32.gmra.mxu0 %v753
        %v919 = vpop.f32.mrf.mxu0
        %v920 = vadd.f32 0.0, %v919
        %v921 = vpop.f32.mrf.mxu0
        %922 = vmatprep.mubr.f32.mxu0 0.0
        %923 = vmatmul.mubr.f32.gmra.mxu0 %v756
        %v924 = vpop.f32.mrf.mxu0
        %v925 = vadd.f32 0.0, %v924
        %v926 = vpop.f32.mrf.mxu0
        %927 = vdwg.mxu0
        %928 = vmatprep.subr.mxu0 0.0
        %929 = vmatpush1.msra.mxu0 0.0
        %930 = vmatprep.subr.mxu0 0.0
        %931 = vmatpush1.msra.mxu0 0.0
        %932 = vmatprep.subr.mxu0 0.0
        %933 = vmatpush1.msra.mxu0 0.0
        %934 = vmatprep.subr.mxu0 0.0
        %935 = vmatpush1.msra.mxu0 0.0
        %936 = vmatprep.subr.mxu0 0.0
        %937 = vmatpush1.msra.mxu0 0.0
        %938 = vmatprep.subr.mxu0 0.0
        %939 = vmatpush1.msra.mxu0 0.0
        %940 = vmatprep.subr.mxu0 0.0
        %941 = vmatpush1.msra.mxu0 0.0
        %942 = vmatprep.subr.mxu0 0.0
        %943 = vmatpush1.msra.mxu0 0.0
        %944 = vmatprep.subr.mxu0 0.0
        %945 = vmatpush1.msra.mxu0 0.0
        %946 = vmatprep.subr.mxu0 0.0
        %947 = vmatpush1.msra.mxu0 0.0
        %948 = vmatprep.subr.mxu0 0.0
        %949 = vmatpush1.msra.mxu0 0.0
        %950 = vmatprep.subr.mxu0 0.0
        %951 = vmatpush1.msra.mxu0 0.0
        %952 = vmatprep.subr.mxu0 0.0
        %953 = vmatpush1.msra.mxu0 0.0
        %954 = vmatprep.subr.mxu0 0.0
        %955 = vmatpush1.msra.mxu0 0.0
        %956 = vmatprep.subr.mxu0 0.0
        %957 = vmatpush1.msra.mxu0 0.0
        %958 = vmatprep.subr.mxu0 0.0
        %959 = vmatpush1.msra.mxu0 %v735
        %960 = vmatprep.subr.mxu0 0.0
        %961 = vmatpush2.msra.mxu0 0.0
        %962 = vmatprep.subr.mxu0 0.0
        %963 = vmatpush2.msra.mxu0 0.0
        %964 = vmatprep.subr.mxu0 0.0
        %965 = vmatpush2.msra.mxu0 0.0
        %966 = vmatprep.subr.mxu0 0.0
        %967 = vmatpush2.msra.mxu0 0.0
        %968 = vmatprep.subr.mxu0 0.0
        %969 = vmatpush2.msra.mxu0 0.0
        %970 = vmatprep.subr.mxu0 0.0
        %971 = vmatpush2.msra.mxu0 0.0
        %972 = vmatprep.subr.mxu0 0.0
        %973 = vmatpush2.msra.mxu0 0.0
        %974 = vmatprep.subr.mxu0 0.0
        %975 = vmatpush2.msra.mxu0 0.0
        %976 = vmatprep.subr.mxu0 0.0
        %977 = vmatpush2.msra.mxu0 0.0
        %978 = vmatprep.subr.mxu0 0.0
        %979 = vmatpush2.msra.mxu0 0.0
        %980 = vmatprep.subr.mxu0 0.0
        %981 = vmatpush2.msra.mxu0 0.0
        %982 = vmatprep.subr.mxu0 0.0
        %983 = vmatpush2.msra.mxu0 0.0
        %984 = vmatprep.subr.mxu0 0.0
        %985 = vmatpush2.msra.mxu0 0.0
        %986 = vmatprep.subr.mxu0 0.0
        %987 = vmatpush2.msra.mxu0 0.0
        %988 = vmatprep.subr.mxu0 0.0
        %989 = vmatpush2.msra.mxu0 0.0
        %990 = vmatprep.subr.mxu0 0.0
        %991 = vmatpush2.msra.mxu0 0.0
        %992 = vmatprep.mubr.f32.mxu0 0.0
        %993 = vmatmul.mubr.f32.gmra.mxu0 %v747
        %v994 = vpop.f32.mrf.mxu0
        %v995 = vadd.f32 0.0, %v994
        %v996 = vpop.f32.mrf.mxu0
        %997 = vmatprep.mubr.f32.mxu0 0.0
        %998 = vmatmul.mubr.f32.gmra.mxu0 %v750
        %v999 = vpop.f32.mrf.mxu0
        %v1000 = vadd.f32 0.0, %v999
        %v1001 = vpop.f32.mrf.mxu0
        %1002 = vmatprep.mubr.f32.mxu0 0.0
        %1003 = vmatmul.mubr.f32.gmra.mxu0 %v753
        %v1004 = vpop.f32.mrf.mxu0
        %v1005 = vadd.f32 0.0, %v1004
        %v1006 = vpop.f32.mrf.mxu0
        %1007 = vmatprep.mubr.f32.mxu0 0.0
        %1008 = vmatmul.mubr.f32.gmra.mxu0 %v756
        %v1009 = vpop.f32.mrf.mxu0
        %v1010 = vadd.f32 0.0, %v1009
        %v1011 = vpop.f32.mrf.mxu0
        %1012 = vdwg.mxu0
        %1013 = vmatprep.subr.mxu0 0.0
        %1014 = vmatpush1.msra.mxu0 0.0
        %1015 = vmatprep.subr.mxu0 0.0
        %1016 = vmatpush1.msra.mxu0 0.0
        %1017 = vmatprep.subr.mxu0 0.0
        %1018 = vmatpush1.msra.mxu0 0.0
        %1019 = vmatprep.subr.mxu0 0.0
        %1020 = vmatpush1.msra.mxu0 0.0
        %1021 = vmatprep.subr.mxu0 0.0
        %1022 = vmatpush1.msra.mxu0 0.0
        %1023 = vmatprep.subr.mxu0 0.0
        %1024 = vmatpush1.msra.mxu0 0.0
        %1025 = vmatprep.subr.mxu0 0.0
        %1026 = vmatpush1.msra.mxu0 0.0
        %1027 = vmatprep.subr.mxu0 0.0
        %1028 = vmatpush1.msra.mxu0 0.0
        %1029 = vmatprep.subr.mxu0 0.0
        %1030 = vmatpush1.msra.mxu0 0.0
        %1031 = vmatprep.subr.mxu0 0.0
        %1032 = vmatpush1.msra.mxu0 0.0
        %1033 = vmatprep.subr.mxu0 0.0
        %1034 = vmatpush1.msra.mxu0 0.0
        %1035 = vmatprep.subr.mxu0 0.0
        %1036 = vmatpush1.msra.mxu0 0.0
        %1037 = vmatprep.subr.mxu0 0.0
        %1038 = vmatpush1.msra.mxu0 0.0
        %1039 = vmatprep.subr.mxu0 0.0
        %1040 = vmatpush1.msra.mxu0 0.0
        %1041 = vmatprep.subr.mxu0 0.0
        %1042 = vmatpush1.msra.mxu0 0.0
        %1043 = vmatprep.subr.mxu0 0.0
        %1044 = vmatpush1.msra.mxu0 %v736
        %1045 = vmatprep.subr.mxu0 0.0
        %1046 = vmatpush2.msra.mxu0 0.0
        %1047 = vmatprep.subr.mxu0 0.0
        %1048 = vmatpush2.msra.mxu0 0.0
        %1049 = vmatprep.subr.mxu0 0.0
        %1050 = vmatpush2.msra.mxu0 0.0
        %1051 = vmatprep.subr.mxu0 0.0
        %1052 = vmatpush2.msra.mxu0 0.0
        %1053 = vmatprep.subr.mxu0 0.0
        %1054 = vmatpush2.msra.mxu0 0.0
        %1055 = vmatprep.subr.mxu0 0.0
        %1056 = vmatpush2.msra.mxu0 0.0
        %1057 = vmatprep.subr.mxu0 0.0
        %1058 = vmatpush2.msra.mxu0 0.0
        %1059 = vmatprep.subr.mxu0 0.0
        %1060 = vmatpush2.msra.mxu0 0.0
        %1061 = vmatprep.subr.mxu0 0.0
        %1062 = vmatpush2.msra.mxu0 0.0
        %1063 = vmatprep.subr.mxu0 0.0
        %1064 = vmatpush2.msra.mxu0 0.0
        %1065 = vmatprep.subr.mxu0 0.0
        %1066 = vmatpush2.msra.mxu0 0.0
        %1067 = vmatprep.subr.mxu0 0.0
        %1068 = vmatpush2.msra.mxu0 0.0
        %1069 = vmatprep.subr.mxu0 0.0
        %1070 = vmatpush2.msra.mxu0 0.0
        %1071 = vmatprep.subr.mxu0 0.0
        %1072 = vmatpush2.msra.mxu0 0.0
        %1073 = vmatprep.subr.mxu0 0.0
        %1074 = vmatpush2.msra.mxu0 0.0
        %1075 = vmatprep.subr.mxu0 0.0
        %1076 = vmatpush2.msra.mxu0 0.0
        %1077 = vmatprep.mubr.f32.mxu0 0.0
        %1078 = vmatmul.mubr.f32.gmra.mxu0 %v747
        %v1079 = vpop.f32.mrf.mxu0
        %v1080 = vadd.f32 0.0, %v1079
        %v1081 = vpop.f32.mrf.mxu0
        %1082 = vmatprep.mubr.f32.mxu0 0.0
        %1083 = vmatmul.mubr.f32.gmra.mxu0 %v750
        %v1084 = vpop.f32.mrf.mxu0
        %v1085 = vadd.f32 0.0, %v1084
        %v1086 = vpop.f32.mrf.mxu0
        %1087 = vmatprep.mubr.f32.mxu0 0.0
        %1088 = vmatmul.mubr.f32.gmra.mxu0 %v753
        %v1089 = vpop.f32.mrf.mxu0
        %v1090 = vadd.f32 0.0, %v1089
        %v1091 = vpop.f32.mrf.mxu0
        %1092 = vmatprep.mubr.f32.mxu0 0.0
        %1093 = vmatmul.mubr.f32.gmra.mxu0 %v756
        %v1094 = vpop.f32.mrf.mxu0
        %v1095 = vadd.f32 0.0, %v1094
        %v1096 = vpop.f32.mrf.mxu0
        %1097 = vdwg.mxu0
        %1098 = vmatprep.subr.mxu0 0.0
        %1099 = vmatpush1.msra.mxu0 0.0
        %1100 = vmatprep.subr.mxu0 0.0
        %1101 = vmatpush1.msra.mxu0 0.0
        %1102 = vmatprep.subr.mxu0 0.0
        %1103 = vmatpush1.msra.mxu0 0.0
        %1104 = vmatprep.subr.mxu0 0.0
        %1105 = vmatpush1.msra.mxu0 0.0
        %1106 = vmatprep.subr.mxu0 0.0
        %1107 = vmatpush1.msra.mxu0 0.0
        %1108 = vmatprep.subr.mxu0 0.0
        %1109 = vmatpush1.msra.mxu0 0.0
        %1110 = vmatprep.subr.mxu0 0.0
        %1111 = vmatpush1.msra.mxu0 0.0
        %1112 = vmatprep.subr.mxu0 0.0
        %1113 = vmatpush1.msra.mxu0 0.0
        %1114 = vmatprep.subr.mxu0 0.0
        %1115 = vmatpush1.msra.mxu0 0.0
        %1116 = vmatprep.subr.mxu0 0.0
        %1117 = vmatpush1.msra.mxu0 0.0
        %1118 = vmatprep.subr.mxu0 0.0
        %1119 = vmatpush1.msra.mxu0 0.0
        %1120 = vmatprep.subr.mxu0 0.0
        %1121 = vmatpush1.msra.mxu0 0.0
        %1122 = vmatprep.subr.mxu0 0.0
        %1123 = vmatpush1.msra.mxu0 0.0
        %1124 = vmatprep.subr.mxu0 0.0
        %1125 = vmatpush1.msra.mxu0 0.0
        %1126 = vmatprep.subr.mxu0 0.0
        %1127 = vmatpush1.msra.mxu0 0.0
        %1128 = vmatprep.subr.mxu0 0.0
        %1129 = vmatpush1.msra.mxu0 %v737
        %1130 = vmatprep.subr.mxu0 0.0
        %1131 = vmatpush2.msra.mxu0 0.0
        %1132 = vmatprep.subr.mxu0 0.0
        %1133 = vmatpush2.msra.mxu0 0.0
        %1134 = vmatprep.subr.mxu0 0.0
        %1135 = vmatpush2.msra.mxu0 0.0
        %1136 = vmatprep.subr.mxu0 0.0
        %1137 = vmatpush2.msra.mxu0 0.0
        %1138 = vmatprep.subr.mxu0 0.0
        %1139 = vmatpush2.msra.mxu0 0.0
        %1140 = vmatprep.subr.mxu0 0.0
        %1141 = vmatpush2.msra.mxu0 0.0
        %1142 = vmatprep.subr.mxu0 0.0
        %1143 = vmatpush2.msra.mxu0 0.0
        %1144 = vmatprep.subr.mxu0 0.0
        %1145 = vmatpush2.msra.mxu0 0.0
        %1146 = vmatprep.subr.mxu0 0.0
        %1147 = vmatpush2.msra.mxu0 0.0
        %1148 = vmatprep.subr.mxu0 0.0
        %1149 = vmatpush2.msra.mxu0 0.0
        %1150 = vmatprep.subr.mxu0 0.0
        %1151 = vmatpush2.msra.mxu0 0.0
        %1152 = vmatprep.subr.mxu0 0.0
        %1153 = vmatpush2.msra.mxu0 0.0
        %1154 = vmatprep.subr.mxu0 0.0
        %1155 = vmatpush2.msra.mxu0 0.0
        %1156 = vmatprep.subr.mxu0 0.0
        %1157 = vmatpush2.msra.mxu0 0.0
        %1158 = vmatprep.subr.mxu0 0.0
        %1159 = vmatpush2.msra.mxu0 0.0
        %1160 = vmatprep.subr.mxu0 0.0
        %1161 = vmatpush2.msra.mxu0 0.0
        %1162 = vmatprep.mubr.f32.mxu0 0.0
        %1163 = vmatmul.mubr.f32.gmra.mxu0 %v747
        %v1164 = vpop.f32.mrf.mxu0
        %v1165 = vadd.f32 0.0, %v1164
        %v1166 = vpop.f32.mrf.mxu0
        %1167 = vmatprep.mubr.f32.mxu0 0.0
        %1168 = vmatmul.mubr.f32.gmra.mxu0 %v750
        %v1169 = vpop.f32.mrf.mxu0
        %v1170 = vadd.f32 0.0, %v1169
        %v1171 = vpop.f32.mrf.mxu0
        %1172 = vmatprep.mubr.f32.mxu0 0.0
        %1173 = vmatmul.mubr.f32.gmra.mxu0 %v753
        %v1174 = vpop.f32.mrf.mxu0
        %v1175 = vadd.f32 0.0, %v1174
        %v1176 = vpop.f32.mrf.mxu0
        %1177 = vmatprep.mubr.f32.mxu0 0.0
        %1178 = vmatmul.mubr.f32.gmra.mxu0 %v756
        %v1179 = vpop.f32.mrf.mxu0
        %v1180 = vadd.f32 0.0, %v1179
        %v1181 = vpop.f32.mrf.mxu0
        %1182 = vdwg.mxu0
        %1183 = vmatprep.subr.mxu0 0.0
        %1184 = vmatpush1.msra.mxu0 0.0
        %1185 = vmatprep.subr.mxu0 0.0
        %1186 = vmatpush1.msra.mxu0 0.0
        %1187 = vmatprep.subr.mxu0 0.0
        %1188 = vmatpush1.msra.mxu0 0.0
        %1189 = vmatprep.subr.mxu0 0.0
        %1190 = vmatpush1.msra.mxu0 0.0
        %1191 = vmatprep.subr.mxu0 0.0
        %1192 = vmatpush1.msra.mxu0 0.0
        %1193 = vmatprep.subr.mxu0 0.0
        %1194 = vmatpush1.msra.mxu0 0.0
        %1195 = vmatprep.subr.mxu0 0.0
        %1196 = vmatpush1.msra.mxu0 0.0
        %1197 = vmatprep.subr.mxu0 0.0
        %1198 = vmatpush1.msra.mxu0 0.0
        %1199 = vmatprep.subr.mxu0 0.0
        %1200 = vmatpush1.msra.mxu0 0.0
        %1201 = vmatprep.subr.mxu0 0.0
        %1202 = vmatpush1.msra.mxu0 0.0
        %1203 = vmatprep.subr.mxu0 0.0
        %1204 = vmatpush1.msra.mxu0 0.0
        %1205 = vmatprep.subr.mxu0 0.0
        %1206 = vmatpush1.msra.mxu0 0.0
        %1207 = vmatprep.subr.mxu0 0.0
        %1208 = vmatpush1.msra.mxu0 0.0
        %1209 = vmatprep.subr.mxu0 0.0
        %1210 = vmatpush1.msra.mxu0 0.0
        %1211 = vmatprep.subr.mxu0 0.0
        %1212 = vmatpush1.msra.mxu0 0.0
        %1213 = vmatprep.subr.mxu0 0.0
        %1214 = vmatpush1.msra.mxu0 %v738
        %1215 = vmatprep.subr.mxu0 0.0
        %1216 = vmatpush2.msra.mxu0 0.0
        %1217 = vmatprep.subr.mxu0 0.0
        %1218 = vmatpush2.msra.mxu0 0.0
        %1219 = vmatprep.subr.mxu0 0.0
        %1220 = vmatpush2.msra.mxu0 0.0
        %1221 = vmatprep.subr.mxu0 0.0
        %1222 = vmatpush2.msra.mxu0 0.0
        %1223 = vmatprep.subr.mxu0 0.0
        %1224 = vmatpush2.msra.mxu0 0.0
        %1225 = vmatprep.subr.mxu0 0.0
        %1226 = vmatpush2.msra.mxu0 0.0
        %1227 = vmatprep.subr.mxu0 0.0
        %1228 = vmatpush2.msra.mxu0 0.0
        %1229 = vmatprep.subr.mxu0 0.0
        %1230 = vmatpush2.msra.mxu0 0.0
        %1231 = vmatprep.subr.mxu0 0.0
        %1232 = vmatpush2.msra.mxu0 0.0
        %1233 = vmatprep.subr.mxu0 0.0
        %1234 = vmatpush2.msra.mxu0 0.0
        %1235 = vmatprep.subr.mxu0 0.0
        %1236 = vmatpush2.msra.mxu0 0.0
        %1237 = vmatprep.subr.mxu0 0.0
        %1238 = vmatpush2.msra.mxu0 0.0
        %1239 = vmatprep.subr.mxu0 0.0
        %1240 = vmatpush2.msra.mxu0 0.0
        %1241 = vmatprep.subr.mxu0 0.0
        %1242 = vmatpush2.msra.mxu0 0.0
        %1243 = vmatprep.subr.mxu0 0.0
        %1244 = vmatpush2.msra.mxu0 0.0
        %1245 = vmatprep.subr.mxu0 0.0
        %1246 = vmatpush2.msra.mxu0 0.0
        %1247 = vmatprep.mubr.f32.mxu0 0.0
        %1248 = vmatmul.mubr.f32.gmra.mxu0 %v747
        %v1249 = vpop.f32.mrf.mxu0
        %v1250 = vadd.f32 0.0, %v1249
        %v1251 = vpop.f32.mrf.mxu0
        %1252 = vmatprep.mubr.f32.mxu0 0.0
        %1253 = vmatmul.mubr.f32.gmra.mxu0 %v750
        %v1254 = vpop.f32.mrf.mxu0
        %v1255 = vadd.f32 0.0, %v1254
        %v1256 = vpop.f32.mrf.mxu0
        %1257 = vmatprep.mubr.f32.mxu0 0.0
        %1258 = vmatmul.mubr.f32.gmra.mxu0 %v753
        %v1259 = vpop.f32.mrf.mxu0
        %v1260 = vadd.f32 0.0, %v1259
        %v1261 = vpop.f32.mrf.mxu0
        %1262 = vmatprep.mubr.f32.mxu0 0.0
        %1263 = vmatmul.mubr.f32.gmra.mxu0 %v756
        %v1264 = vpop.f32.mrf.mxu0
        %v1265 = vadd.f32 0.0, %v1264
        %v1266 = vpop.f32.mrf.mxu0
        %1267 = vdwg.mxu0
        %1268 = vmatprep.subr.mxu0 0.0
        %1269 = vmatpush1.msra.mxu0 0.0
        %1270 = vmatprep.subr.mxu0 0.0
        %1271 = vmatpush1.msra.mxu0 0.0
        %1272 = vmatprep.subr.mxu0 0.0
        %1273 = vmatpush1.msra.mxu0 0.0
        %1274 = vmatprep.subr.mxu0 0.0
        %1275 = vmatpush1.msra.mxu0 0.0
        %1276 = vmatprep.subr.mxu0 0.0
        %1277 = vmatpush1.msra.mxu0 0.0
        %1278 = vmatprep.subr.mxu0 0.0
        %1279 = vmatpush1.msra.mxu0 0.0
        %1280 = vmatprep.subr.mxu0 0.0
        %1281 = vmatpush1.msra.mxu0 0.0
        %1282 = vmatprep.subr.mxu0 0.0
        %1283 = vmatpush1.msra.mxu0 0.0
        %1284 = vmatprep.subr.mxu0 0.0
        %1285 = vmatpush1.msra.mxu0 0.0
        %1286 = vmatprep.subr.mxu0 0.0
        %1287 = vmatpush1.msra.mxu0 0.0
        %1288 = vmatprep.subr.mxu0 0.0
        %1289 = vmatpush1.msra.mxu0 0.0
        %1290 = vmatprep.subr.mxu0 0.0
        %1291 = vmatpush1.msra.mxu0 0.0
        %1292 = vmatprep.subr.mxu0 0.0
        %1293 = vmatpush1.msra.mxu0 0.0
        %1294 = vmatprep.subr.mxu0 0.0
        %1295 = vmatpush1.msra.mxu0 0.0
        %1296 = vmatprep.subr.mxu0 0.0
        %1297 = vmatpush1.msra.mxu0 0.0
        %1298 = vmatprep.subr.mxu0 0.0
        %1299 = vmatpush1.msra.mxu0 %v739
        %1300 = vmatprep.subr.mxu0 0.0
        %1301 = vmatpush2.msra.mxu0 0.0
        %1302 = vmatprep.subr.mxu0 0.0
        %1303 = vmatpush2.msra.mxu0 0.0
        %1304 = vmatprep.subr.mxu0 0.0
        %1305 = vmatpush2.msra.mxu0 0.0
        %1306 = vmatprep.subr.mxu0 0.0
        %1307 = vmatpush2.msra.mxu0 0.0
        %1308 = vmatprep.subr.mxu0 0.0
        %1309 = vmatpush2.msra.mxu0 0.0
        %1310 = vmatprep.subr.mxu0 0.0
        %1311 = vmatpush2.msra.mxu0 0.0
        %1312 = vmatprep.subr.mxu0 0.0
        %1313 = vmatpush2.msra.mxu0 0.0
        %1314 = vmatprep.subr.mxu0 0.0
        %1315 = vmatpush2.msra.mxu0 0.0
        %1316 = vmatprep.subr.mxu0 0.0
        %1317 = vmatpush2.msra.mxu0 0.0
        %1318 = vmatprep.subr.mxu0 0.0
        %1319 = vmatpush2.msra.mxu0 0.0
        %1320 = vmatprep.subr.mxu0 0.0
        %1321 = vmatpush2.msra.mxu0 0.0
        %1322 = vmatprep.subr.mxu0 0.0
        %1323 = vmatpush2.msra.mxu0 0.0
        %1324 = vmatprep.subr.mxu0 0.0
        %1325 = vmatpush2.msra.mxu0 0.0
        %1326 = vmatprep.subr.mxu0 0.0
        %1327 = vmatpush2.msra.mxu0 0.0
        %1328 = vmatprep.subr.mxu0 0.0
        %1329 = vmatpush2.msra.mxu0 0.0
        %1330 = vmatprep.subr.mxu0 0.0
        %1331 = vmatpush2.msra.mxu0 0.0
        %1332 = vmatprep.mubr.f32.mxu0 0.0
        %1333 = vmatmul.mubr.f32.gmra.mxu0 %v747
        %v1334 = vpop.f32.mrf.mxu0
        %v1335 = vadd.f32 0.0, %v1334
        %v1336 = vpop.f32.mrf.mxu0
        %1337 = vmatprep.mubr.f32.mxu0 0.0
        %1338 = vmatmul.mubr.f32.gmra.mxu0 %v750
        %v1339 = vpop.f32.mrf.mxu0
        %v1340 = vadd.f32 0.0, %v1339
        %v1341 = vpop.f32.mrf.mxu0
        %1342 = vmatprep.mubr.f32.mxu0 0.0
        %1343 = vmatmul.mubr.f32.gmra.mxu0 %v753
        %v1344 = vpop.f32.mrf.mxu0
        %v1345 = vadd.f32 0.0, %v1344
        %v1346 = vpop.f32.mrf.mxu0
        %1347 = vmatprep.mubr.f32.mxu0 0.0
        %1348 = vmatmul.mubr.f32.gmra.mxu0 %v756
        %v1349 = vpop.f32.mrf.mxu0
        %v1350 = vadd.f32 0.0, %v1349
        %v1351 = vpop.f32.mrf.mxu0
        %1352 = vdwg.mxu0
        %1353 = vmatprep.subr.mxu0 0.0
        %1354 = vmatpush1.msra.mxu0 0.0
        %1355 = vmatprep.subr.mxu0 0.0
        %1356 = vmatpush1.msra.mxu0 0.0
        %1357 = vmatprep.subr.mxu0 0.0
        %1358 = vmatpush1.msra.mxu0 0.0
        %1359 = vmatprep.subr.mxu0 0.0
        %1360 = vmatpush1.msra.mxu0 0.0
        %1361 = vmatprep.subr.mxu0 0.0
        %1362 = vmatpush1.msra.mxu0 0.0
        %1363 = vmatprep.subr.mxu0 0.0
        %1364 = vmatpush1.msra.mxu0 0.0
        %1365 = vmatprep.subr.mxu0 0.0
        %1366 = vmatpush1.msra.mxu0 0.0
        %1367 = vmatprep.subr.mxu0 0.0
        %1368 = vmatpush1.msra.mxu0 0.0
        %1369 = vmatprep.subr.mxu0 0.0
        %1370 = vmatpush1.msra.mxu0 0.0
        %1371 = vmatprep.subr.mxu0 0.0
        %1372 = vmatpush1.msra.mxu0 0.0
        %1373 = vmatprep.subr.mxu0 0.0
        %1374 = vmatpush1.msra.mxu0 0.0
        %1375 = vmatprep.subr.mxu0 0.0
        %1376 = vmatpush1.msra.mxu0 0.0
        %1377 = vmatprep.subr.mxu0 0.0
        %1378 = vmatpush1.msra.mxu0 0.0
        %1379 = vmatprep.subr.mxu0 0.0
        %1380 = vmatpush1.msra.mxu0 0.0
        %1381 = vmatprep.subr.mxu0 0.0
        %1382 = vmatpush1.msra.mxu0 0.0
        %1383 = vmatprep.subr.mxu0 0.0
        %1384 = vmatpush1.msra.mxu0 %v740
        %1385 = vmatprep.subr.mxu0 0.0
        %1386 = vmatpush2.msra.mxu0 0.0
        %1387 = vmatprep.subr.mxu0 0.0
        %1388 = vmatpush2.msra.mxu0 0.0
        %1389 = vmatprep.subr.mxu0 0.0
        %1390 = vmatpush2.msra.mxu0 0.0
        %1391 = vmatprep.subr.mxu0 0.0
        %1392 = vmatpush2.msra.mxu0 0.0
        %1393 = vmatprep.subr.mxu0 0.0
        %1394 = vmatpush2.msra.mxu0 0.0
        %1395 = vmatprep.subr.mxu0 0.0
        %1396 = vmatpush2.msra.mxu0 0.0
        %1397 = vmatprep.subr.mxu0 0.0
        %1398 = vmatpush2.msra.mxu0 0.0
        %1399 = vmatprep.subr.mxu0 0.0
        %1400 = vmatpush2.msra.mxu0 0.0
        %1401 = vmatprep.subr.mxu0 0.0
        %1402 = vmatpush2.msra.mxu0 0.0
        %1403 = vmatprep.subr.mxu0 0.0
        %1404 = vmatpush2.msra.mxu0 0.0
        %1405 = vmatprep.subr.mxu0 0.0
        %1406 = vmatpush2.msra.mxu0 0.0
        %1407 = vmatprep.subr.mxu0 0.0
        %1408 = vmatpush2.msra.mxu0 0.0
        %1409 = vmatprep.subr.mxu0 0.0
        %1410 = vmatpush2.msra.mxu0 0.0
        %1411 = vmatprep.subr.mxu0 0.0
        %1412 = vmatpush2.msra.mxu0 0.0
        %1413 = vmatprep.subr.mxu0 0.0
        %1414 = vmatpush2.msra.mxu0 0.0
        %1415 = vmatprep.subr.mxu0 0.0
        %1416 = vmatpush2.msra.mxu0 0.0
        %1417 = vmatprep.mubr.f32.mxu0 0.0
        %1418 = vmatmul.mubr.f32.gmra.mxu0 %v747
        %v1419 = vpop.f32.mrf.mxu0
        %v1420 = vadd.f32 0.0, %v1419
        %v1421 = vpop.f32.mrf.mxu0
        %1422 = vmatprep.mubr.f32.mxu0 0.0
        %1423 = vmatmul.mubr.f32.gmra.mxu0 %v750
        %v1424 = vpop.f32.mrf.mxu0
        %v1425 = vadd.f32 0.0, %v1424
        %v1426 = vpop.f32.mrf.mxu0
        %1427 = vmatprep.mubr.f32.mxu0 0.0
        %1428 = vmatmul.mubr.f32.gmra.mxu0 %v753
        %v1429 = vpop.f32.mrf.mxu0
        %v1430 = vadd.f32 0.0, %v1429
        %v1431 = vpop.f32.mrf.mxu0
        %1432 = vmatprep.mubr.f32.mxu0 0.0
        %1433 = vmatmul.mubr.f32.gmra.mxu0 %v756
        %v1434 = vpop.f32.mrf.mxu0
        %v1435 = vadd.f32 0.0, %v1434
        %v1436 = vpop.f32.mrf.mxu0
        %1437 = vdwg.mxu0
        %v1438 = vld [vmem:[%s4] sm:$0xff]
        %v1440 = vsel %vm745, %v825, 0
        %v1443 = vsel %vm745, %v830, 0
        %v1446 = vsel %vm745, %v835, 0
        %v1449 = vsel %vm745, %v840, 0
        %1451 = vmatprep.subr.mxu0 0.0
        %1452 = vmatpush1.msra.mxu0 0.0
        %1453 = vmatprep.subr.mxu0 0.0
        %1454 = vmatpush1.msra.mxu0 0.0
        %1455 = vmatprep.subr.mxu0 0.0
        %1456 = vmatpush1.msra.mxu0 0.0
        %1457 = vmatprep.subr.mxu0 0.0
        %1458 = vmatpush1.msra.mxu0 0.0
        %1459 = vmatprep.subr.mxu0 0.0
        %1460 = vmatpush1.msra.mxu0 0.0
        %1461 = vmatprep.subr.mxu0 0.0
        %1462 = vmatpush1.msra.mxu0 0.0
        %1463 = vmatprep.subr.mxu0 0.0
        %1464 = vmatpush1.msra.mxu0 0.0
        %1465 = vmatprep.subr.mxu0 0.0
        %1466 = vmatpush1.msra.mxu0 0.0
        %1467 = vmatprep.subr.mxu0 0.0
        %1468 = vmatpush1.msra.mxu0 0.0
        %1469 = vmatprep.subr.mxu0 0.0
        %1470 = vmatpush1.msra.mxu0 0.0
        %1471 = vmatprep.subr.mxu0 0.0
        %1472 = vmatpush1.msra.mxu0 0.0
        %1473 = vmatprep.subr.mxu0 0.0
        %1474 = vmatpush1.msra.mxu0 0.0
        %1475 = vmatprep.subr.mxu0 0.0
        %1476 = vmatpush1.msra.mxu0 0.0
        %1477 = vmatprep.subr.mxu0 0.0
        %1478 = vmatpush1.msra.mxu0 0.0
        %1479 = vmatprep.subr.mxu0 0.0
        %1480 = vmatpush1.msra.mxu0 0.0
        %1481 = vmatprep.subr.mxu0 0.0
        %1482 = vmatpush1.msra.mxu0 %v1438
        %1483 = vmatprep.subr.mxu0 0.0
        %1484 = vmatpush2.msra.mxu0 0.0
        %1485 = vmatprep.subr.mxu0 0.0
        %1486 = vmatpush2.msra.mxu0 0.0
        %1487 = vmatprep.subr.mxu0 0.0
        %1488 = vmatpush2.msra.mxu0 0.0
        %1489 = vmatprep.subr.mxu0 0.0
        %1490 = vmatpush2.msra.mxu0 0.0
        %1491 = vmatprep.subr.mxu0 0.0
        %1492 = vmatpush2.msra.mxu0 0.0
        %1493 = vmatprep.subr.mxu0 0.0
        %1494 = vmatpush2.msra.mxu0 0.0
        %1495 = vmatprep.subr.mxu0 0.0
        %1496 = vmatpush2.msra.mxu0 0.0
        %1497 = vmatprep.subr.mxu0 0.0
        %1498 = vmatpush2.msra.mxu0 0.0
        %1499 = vmatprep.subr.mxu0 0.0
        %1500 = vmatpush2.msra.mxu0 0.0
        %1501 = vmatprep.subr.mxu0 0.0
        %1502 = vmatpush2.msra.mxu0 0.0
        %1503 = vmatprep.subr.mxu0 0.0
        %1504 = vmatpush2.msra.mxu0 0.0
        %1505 = vmatprep.subr.mxu0 0.0
        %1506 = vmatpush2.msra.mxu0 0.0
        %1507 = vmatprep.subr.mxu0 0.0
        %1508 = vmatpush2.msra.mxu0 0.0
        %1509 = vmatprep.subr.mxu0 0.0
        %1510 = vmatpush2.msra.mxu0 0.0
        %1511 = vmatprep.subr.mxu0 0.0
        %1512 = vmatpush2.msra.mxu0 0.0
        %1513 = vmatprep.subr.mxu0 0.0
        %1514 = vmatpush2.msra.mxu0 0.0
        %1515 = vmatprep.mubr.f32.mxu0 0.0
        %1516 = vmatmul.mubr.f32.gmra.mxu0 %v1440
        %v1517 = vpop.f32.mrf.mxu0
        %v1518 = vadd.f32 0.0, %v1517
        %v1519 = vpop.f32.mrf.mxu0
        %1520 = vmatprep.mubr.f32.mxu0 0.0
        %1521 = vmatmul.mubr.f32.gmra.mxu0 %v1443
        %v1522 = vpop.f32.mrf.mxu0
        %v1523 = vadd.f32 0.0, %v1522
        %v1524 = vpop.f32.mrf.mxu0
        %1525 = vmatprep.mubr.f32.mxu0 0.0
        %1526 = vmatmul.mubr.f32.gmra.mxu0 %v1446
        %v1527 = vpop.f32.mrf.mxu0
        %v1528 = vadd.f32 0.0, %v1527
        %v1529 = vpop.f32.mrf.mxu0
        %1530 = vmatprep.mubr.f32.mxu0 0.0
        %1531 = vmatmul.mubr.f32.gmra.mxu0 %v1449
        %v1532 = vpop.f32.mrf.mxu0
        %v1533 = vadd.f32 0.0, %v1532
        %v1534 = vpop.f32.mrf.mxu0
        %1535 = vdwg.mxu0
        %v1537 = vsel %vm745, %v910, 0
        %v1540 = vsel %vm745, %v915, 0
        %v1543 = vsel %vm745, %v920, 0
        %v1546 = vsel %vm745, %v925, 0
        %1548 = vmatprep.subr.mxu0 0.0
        %1549 = vmatpush1.msra.mxu0 0.0
        %1550 = vmatprep.subr.mxu0 0.0
        %1551 = vmatpush1.msra.mxu0 0.0
        %1552 = vmatprep.subr.mxu0 0.0
        %1553 = vmatpush1.msra.mxu0 0.0
        %1554 = vmatprep.subr.mxu0 0.0
        %1555 = vmatpush1.msra.mxu0 0.0
        %1556 = vmatprep.subr.mxu0 0.0
        %1557 = vmatpush1.msra.mxu0 0.0
        %1558 = vmatprep.subr.mxu0 0.0
        %1559 = vmatpush1.msra.mxu0 0.0
        %1560 = vmatprep.subr.mxu0 0.0
        %1561 = vmatpush1.msra.mxu0 0.0
        %1562 = vmatprep.subr.mxu0 0.0
        %1563 = vmatpush1.msra.mxu0 0.0
        %1564 = vmatprep.subr.mxu0 0.0
        %1565 = vmatpush1.msra.mxu0 0.0
        %1566 = vmatprep.subr.mxu0 0.0
        %1567 = vmatpush1.msra.mxu0 0.0
        %1568 = vmatprep.subr.mxu0 0.0
        %1569 = vmatpush1.msra.mxu0 0.0
        %1570 = vmatprep.subr.mxu0 0.0
        %1571 = vmatpush1.msra.mxu0 0.0
        %1572 = vmatprep.subr.mxu0 0.0
        %1573 = vmatpush1.msra.mxu0 0.0
        %1574 = vmatprep.subr.mxu0 0.0
        %1575 = vmatpush1.msra.mxu0 0.0
        %1576 = vmatprep.subr.mxu0 0.0
        %1577 = vmatpush1.msra.mxu0 0.0
        %1578 = vmatprep.subr.mxu0 0.0
        %1579 = vmatpush1.msra.mxu0 %v1438
        %1580 = vmatprep.subr.mxu0 0.0
        %1581 = vmatpush2.msra.mxu0 0.0
        %1582 = vmatprep.subr.mxu0 0.0
        %1583 = vmatpush2.msra.mxu0 0.0
        %1584 = vmatprep.subr.mxu0 0.0
        %1585 = vmatpush2.msra.mxu0 0.0
        %1586 = vmatprep.subr.mxu0 0.0
        %1587 = vmatpush2.msra.mxu0 0.0
        %1588 = vmatprep.subr.mxu0 0.0
        %1589 = vmatpush2.msra.mxu0 0.0
        %1590 = vmatprep.subr.mxu0 0.0
        %1591 = vmatpush2.msra.mxu0 0.0
        %1592 = vmatprep.subr.mxu0 0.0
        %1593 = vmatpush2.msra.mxu0 0.0
        %1594 = vmatprep.subr.mxu0 0.0
        %1595 = vmatpush2.msra.mxu0 0.0
        %1596 = vmatprep.subr.mxu0 0.0
        %1597 = vmatpush2.msra.mxu0 0.0
        %1598 = vmatprep.subr.mxu0 0.0
        %1599 = vmatpush2.msra.mxu0 0.0
        %1600 = vmatprep.subr.mxu0 0.0
        %1601 = vmatpush2.msra.mxu0 0.0
        %1602 = vmatprep.subr.mxu0 0.0
        %1603 = vmatpush2.msra.mxu0 0.0
        %1604 = vmatprep.subr.mxu0 0.0
        %1605 = vmatpush2.msra.mxu0 0.0
        %1606 = vmatprep.subr.mxu0 0.0
        %1607 = vmatpush2.msra.mxu0 0.0
        %1608 = vmatprep.subr.mxu0 0.0
        %1609 = vmatpush2.msra.mxu0 0.0
        %1610 = vmatprep.subr.mxu0 0.0
        %1611 = vmatpush2.msra.mxu0 0.0
        %1612 = vmatprep.mubr.f32.mxu0 0.0
        %1613 = vmatmul.mubr.f32.gmra.mxu0 %v1537
        %v1614 = vpop.f32.mrf.mxu0
        %v1615 = vadd.f32 0.0, %v1614
        %v1616 = vpop.f32.mrf.mxu0
        %1617 = vmatprep.mubr.f32.mxu0 0.0
        %1618 = vmatmul.mubr.f32.gmra.mxu0 %v1540
        %v1619 = vpop.f32.mrf.mxu0
        %v1620 = vadd.f32 0.0, %v1619
        %v1621 = vpop.f32.mrf.mxu0
        %1622 = vmatprep.mubr.f32.mxu0 0.0
        %1623 = vmatmul.mubr.f32.gmra.mxu0 %v1543
        %v1624 = vpop.f32.mrf.mxu0
        %v1625 = vadd.f32 0.0, %v1624
        %v1626 = vpop.f32.mrf.mxu0
        %1627 = vmatprep.mubr.f32.mxu0 0.0
        %1628 = vmatmul.mubr.f32.gmra.mxu0 %v1546
        %v1629 = vpop.f32.mrf.mxu0
        %v1630 = vadd.f32 0.0, %v1629
        %v1631 = vpop.f32.mrf.mxu0
        %1632 = vdwg.mxu0
        %v1634 = vsel %vm745, %v995, 0
        %v1637 = vsel %vm745, %v1000, 0
        %v1640 = vsel %vm745, %v1005, 0
        %v1643 = vsel %vm745, %v1010, 0
        %1645 = vmatprep.subr.mxu0 0.0
        %1646 = vmatpush1.msra.mxu0 0.0
        %1647 = vmatprep.subr.mxu0 0.0
        %1648 = vmatpush1.msra.mxu0 0.0
        %1649 = vmatprep.subr.mxu0 0.0
        %1650 = vmatpush1.msra.mxu0 0.0
        %1651 = vmatprep.subr.mxu0 0.0
        %1652 = vmatpush1.msra.mxu0 0.0
        %1653 = vmatprep.subr.mxu0 0.0
        %1654 = vmatpush1.msra.mxu0 0.0
        %1655 = vmatprep.subr.mxu0 0.0
        %1656 = vmatpush1.msra.mxu0 0.0
        %1657 = vmatprep.subr.mxu0 0.0
        %1658 = vmatpush1.msra.mxu0 0.0
        %1659 = vmatprep.subr.mxu0 0.0
        %1660 = vmatpush1.msra.mxu0 0.0
        %1661 = vmatprep.subr.mxu0 0.0
        %1662 = vmatpush1.msra.mxu0 0.0
        %1663 = vmatprep.subr.mxu0 0.0
        %1664 = vmatpush1.msra.mxu0 0.0
        %1665 = vmatprep.subr.mxu0 0.0
        %1666 = vmatpush1.msra.mxu0 0.0
        %1667 = vmatprep.subr.mxu0 0.0
        %1668 = vmatpush1.msra.mxu0 0.0
        %1669 = vmatprep.subr.mxu0 0.0
        %1670 = vmatpush1.msra.mxu0 0.0
        %1671 = vmatprep.subr.mxu0 0.0
        %1672 = vmatpush1.msra.mxu0 0.0
        %1673 = vmatprep.subr.mxu0 0.0
        %1674 = vmatpush1.msra.mxu0 0.0
        %1675 = vmatprep.subr.mxu0 0.0
        %1676 = vmatpush1.msra.mxu0 %v1438
        %1677 = vmatprep.subr.mxu0 0.0
        %1678 = vmatpush2.msra.mxu0 0.0
        %1679 = vmatprep.subr.mxu0 0.0
        %1680 = vmatpush2.msra.mxu0 0.0
        %1681 = vmatprep.subr.mxu0 0.0
        %1682 = vmatpush2.msra.mxu0 0.0
        %1683 = vmatprep.subr.mxu0 0.0
        %1684 = vmatpush2.msra.mxu0 0.0
        %1685 = vmatprep.subr.mxu0 0.0
        %1686 = vmatpush2.msra.mxu0 0.0
        %1687 = vmatprep.subr.mxu0 0.0
        %1688 = vmatpush2.msra.mxu0 0.0
        %1689 = vmatprep.subr.mxu0 0.0
        %1690 = vmatpush2.msra.mxu0 0.0
        %1691 = vmatprep.subr.mxu0 0.0
        %1692 = vmatpush2.msra.mxu0 0.0
        %1693 = vmatprep.subr.mxu0 0.0
        %1694 = vmatpush2.msra.mxu0 0.0
        %1695 = vmatprep.subr.mxu0 0.0
        %1696 = vmatpush2.msra.mxu0 0.0
        %1697 = vmatprep.subr.mxu0 0.0
        %1698 = vmatpush2.msra.mxu0 0.0
        %1699 = vmatprep.subr.mxu0 0.0
        %1700 = vmatpush2.msra.mxu0 0.0
        %1701 = vmatprep.subr.mxu0 0.0
        %1702 = vmatpush2.msra.mxu0 0.0
        %1703 = vmatprep.subr.mxu0 0.0
        %1704 = vmatpush2.msra.mxu0 0.0
        %1705 = vmatprep.subr.mxu0 0.0
        %1706 = vmatpush2.msra.mxu0 0.0
        %1707 = vmatprep.subr.mxu0 0.0
        %1708 = vmatpush2.msra.mxu0 0.0
        %1709 = vmatprep.mubr.f32.mxu0 0.0
        %1710 = vmatmul.mubr.f32.gmra.mxu0 %v1634
        %v1711 = vpop.f32.mrf.mxu0
        %v1712 = vadd.f32 0.0, %v1711
        %v1713 = vpop.f32.mrf.mxu0
        %1714 = vmatprep.mubr.f32.mxu0 0.0
        %1715 = vmatmul.mubr.f32.gmra.mxu0 %v1637
        %v1716 = vpop.f32.mrf.mxu0
        %v1717 = vadd.f32 0.0, %v1716
        %v1718 = vpop.f32.mrf.mxu0
        %1719 = vmatprep.mubr.f32.mxu0 0.0
        %1720 = vmatmul.mubr.f32.gmra.mxu0 %v1640
        %v1721 = vpop.f32.mrf.mxu0
        %v1722 = vadd.f32 0.0, %v1721
        %v1723 = vpop.f32.mrf.mxu0
        %1724 = vmatprep.mubr.f32.mxu0 0.0
        %1725 = vmatmul.mubr.f32.gmra.mxu0 %v1643
        %v1726 = vpop.f32.mrf.mxu0
        %v1727 = vadd.f32 0.0, %v1726
        %v1728 = vpop.f32.mrf.mxu0
        %1729 = vdwg.mxu0
        %v1731 = vsel %vm745, %v1080, 0
        %v1734 = vsel %vm745, %v1085, 0
        %v1737 = vsel %vm745, %v1090, 0
        %v1740 = vsel %vm745, %v1095, 0
        %1742 = vmatprep.subr.mxu0 0.0
        %1743 = vmatpush1.msra.mxu0 0.0
        %1744 = vmatprep.subr.mxu0 0.0
        %1745 = vmatpush1.msra.mxu0 0.0
        %1746 = vmatprep.subr.mxu0 0.0
        %1747 = vmatpush1.msra.mxu0 0.0
        %1748 = vmatprep.subr.mxu0 0.0
        %1749 = vmatpush1.msra.mxu0 0.0
        %1750 = vmatprep.subr.mxu0 0.0
        %1751 = vmatpush1.msra.mxu0 0.0
        %1752 = vmatprep.subr.mxu0 0.0
        %1753 = vmatpush1.msra.mxu0 0.0
        %1754 = vmatprep.subr.mxu0 0.0
        %1755 = vmatpush1.msra.mxu0 0.0
        %1756 = vmatprep.subr.mxu0 0.0
        %1757 = vmatpush1.msra.mxu0 0.0
        %1758 = vmatprep.subr.mxu0 0.0
        %1759 = vmatpush1.msra.mxu0 0.0
        %1760 = vmatprep.subr.mxu0 0.0
        %1761 = vmatpush1.msra.mxu0 0.0
        %1762 = vmatprep.subr.mxu0 0.0
        %1763 = vmatpush1.msra.mxu0 0.0
        %1764 = vmatprep.subr.mxu0 0.0
        %1765 = vmatpush1.msra.mxu0 0.0
        %1766 = vmatprep.subr.mxu0 0.0
        %1767 = vmatpush1.msra.mxu0 0.0
        %1768 = vmatprep.subr.mxu0 0.0
        %1769 = vmatpush1.msra.mxu0 0.0
        %1770 = vmatprep.subr.mxu0 0.0
        %1771 = vmatpush1.msra.mxu0 0.0
        %1772 = vmatprep.subr.mxu0 0.0
        %1773 = vmatpush1.msra.mxu0 %v1438
        %1774 = vmatprep.subr.mxu0 0.0
        %1775 = vmatpush2.msra.mxu0 0.0
        %1776 = vmatprep.subr.mxu0 0.0
        %1777 = vmatpush2.msra.mxu0 0.0
        %1778 = vmatprep.subr.mxu0 0.0
        %1779 = vmatpush2.msra.mxu0 0.0
        %1780 = vmatprep.subr.mxu0 0.0
        %1781 = vmatpush2.msra.mxu0 0.0
        %1782 = vmatprep.subr.mxu0 0.0
        %1783 = vmatpush2.msra.mxu0 0.0
        %1784 = vmatprep.subr.mxu0 0.0
        %1785 = vmatpush2.msra.mxu0 0.0
        %1786 = vmatprep.subr.mxu0 0.0
        %1787 = vmatpush2.msra.mxu0 0.0
        %1788 = vmatprep.subr.mxu0 0.0
        %1789 = vmatpush2.msra.mxu0 0.0
        %1790 = vmatprep.subr.mxu0 0.0
        %1791 = vmatpush2.msra.mxu0 0.0
        %1792 = vmatprep.subr.mxu0 0.0
        %1793 = vmatpush2.msra.mxu0 0.0
        %1794 = vmatprep.subr.mxu0 0.0
        %1795 = vmatpush2.msra.mxu0 0.0
        %1796 = vmatprep.subr.mxu0 0.0
        %1797 = vmatpush2.msra.mxu0 0.0
        %1798 = vmatprep.subr.mxu0 0.0
        %1799 = vmatpush2.msra.mxu0 0.0
        %1800 = vmatprep.subr.mxu0 0.0
        %1801 = vmatpush2.msra.mxu0 0.0
        %1802 = vmatprep.subr.mxu0 0.0
        %1803 = vmatpush2.msra.mxu0 0.0
        %1804 = vmatprep.subr.mxu0 0.0
        %1805 = vmatpush2.msra.mxu0 0.0
        %1806 = vmatprep.mubr.f32.mxu0 0.0
        %1807 = vmatmul.mubr.f32.gmra.mxu0 %v1731
        %v1808 = vpop.f32.mrf.mxu0
        %v1809 = vadd.f32 0.0, %v1808
        %v1810 = vpop.f32.mrf.mxu0
        %1811 = vmatprep.mubr.f32.mxu0 0.0
        %1812 = vmatmul.mubr.f32.gmra.mxu0 %v1734
        %v1813 = vpop.f32.mrf.mxu0
        %v1814 = vadd.f32 0.0, %v1813
        %v1815 = vpop.f32.mrf.mxu0
        %1816 = vmatprep.mubr.f32.mxu0 0.0
        %1817 = vmatmul.mubr.f32.gmra.mxu0 %v1737
        %v1818 = vpop.f32.mrf.mxu0
        %v1819 = vadd.f32 0.0, %v1818
        %v1820 = vpop.f32.mrf.mxu0
        %1821 = vmatprep.mubr.f32.mxu0 0.0
        %1822 = vmatmul.mubr.f32.gmra.mxu0 %v1740
        %v1823 = vpop.f32.mrf.mxu0
        %v1824 = vadd.f32 0.0, %v1823
        %v1825 = vpop.f32.mrf.mxu0
        %1826 = vdwg.mxu0
        %v1828 = vsel %vm745, %v1165, 0
        %v1831 = vsel %vm745, %v1170, 0
        %v1834 = vsel %vm745, %v1175, 0
        %v1837 = vsel %vm745, %v1180, 0
        %1839 = vmatprep.subr.mxu0 0.0
        %1840 = vmatpush1.msra.mxu0 0.0
        %1841 = vmatprep.subr.mxu0 0.0
        %1842 = vmatpush1.msra.mxu0 0.0
        %1843 = vmatprep.subr.mxu0 0.0
        %1844 = vmatpush1.msra.mxu0 0.0
        %1845 = vmatprep.subr.mxu0 0.0
        %1846 = vmatpush1.msra.mxu0 0.0
        %1847 = vmatprep.subr.mxu0 0.0
        %1848 = vmatpush1.msra.mxu0 0.0
        %1849 = vmatprep.subr.mxu0 0.0
        %1850 = vmatpush1.msra.mxu0 0.0
        %1851 = vmatprep.subr.mxu0 0.0
        %1852 = vmatpush1.msra.mxu0 0.0
        %1853 = vmatprep.subr.mxu0 0.0
        %1854 = vmatpush1.msra.mxu0 0.0
        %1855 = vmatprep.subr.mxu0 0.0
        %1856 = vmatpush1.msra.mxu0 0.0
        %1857 = vmatprep.subr.mxu0 0.0
        %1858 = vmatpush1.msra.mxu0 0.0
        %1859 = vmatprep.subr.mxu0 0.0
        %1860 = vmatpush1.msra.mxu0 0.0
        %1861 = vmatprep.subr.mxu0 0.0
        %1862 = vmatpush1.msra.mxu0 0.0
        %1863 = vmatprep.subr.mxu0 0.0
        %1864 = vmatpush1.msra.mxu0 0.0
        %1865 = vmatprep.subr.mxu0 0.0
        %1866 = vmatpush1.msra.mxu0 0.0
        %1867 = vmatprep.subr.mxu0 0.0
        %1868 = vmatpush1.msra.mxu0 0.0
        %1869 = vmatprep.subr.mxu0 0.0
        %1870 = vmatpush1.msra.mxu0 %v1438
        %1871 = vmatprep.subr.mxu0 0.0
        %1872 = vmatpush2.msra.mxu0 0.0
        %1873 = vmatprep.subr.mxu0 0.0
        %1874 = vmatpush2.msra.mxu0 0.0
        %1875 = vmatprep.subr.mxu0 0.0
        %1876 = vmatpush2.msra.mxu0 0.0
        %1877 = vmatprep.subr.mxu0 0.0
        %1878 = vmatpush2.msra.mxu0 0.0
        %1879 = vmatprep.subr.mxu0 0.0
        %1880 = vmatpush2.msra.mxu0 0.0
        %1881 = vmatprep.subr.mxu0 0.0
        %1882 = vmatpush2.msra.mxu0 0.0
        %1883 = vmatprep.subr.mxu0 0.0
        %1884 = vmatpush2.msra.mxu0 0.0
        %1885 = vmatprep.subr.mxu0 0.0
        %1886 = vmatpush2.msra.mxu0 0.0
        %1887 = vmatprep.subr.mxu0 0.0
        %1888 = vmatpush2.msra.mxu0 0.0
        %1889 = vmatprep.subr.mxu0 0.0
        %1890 = vmatpush2.msra.mxu0 0.0
        %1891 = vmatprep.subr.mxu0 0.0
        %1892 = vmatpush2.msra.mxu0 0.0
        %1893 = vmatprep.subr.mxu0 0.0
        %1894 = vmatpush2.msra.mxu0 0.0
        %1895 = vmatprep.subr.mxu0 0.0
        %1896 = vmatpush2.msra.mxu0 0.0
        %1897 = vmatprep.subr.mxu0 0.0
        %1898 = vmatpush2.msra.mxu0 0.0
        %1899 = vmatprep.subr.mxu0 0.0
        %1900 = vmatpush2.msra.mxu0 0.0
        %1901 = vmatprep.subr.mxu0 0.0
        %1902 = vmatpush2.msra.mxu0 0.0
        %1903 = vmatprep.mubr.f32.mxu0 0.0
        %1904 = vmatmul.mubr.f32.gmra.mxu0 %v1828
        %v1905 = vpop.f32.mrf.mxu0
        %v1906 = vadd.f32 0.0, %v1905
        %v1907 = vpop.f32.mrf.mxu0
        %1908 = vmatprep.mubr.f32.mxu0 0.0
        %1909 = vmatmul.mubr.f32.gmra.mxu0 %v1831
        %v1910 = vpop.f32.mrf.mxu0
        %v1911 = vadd.f32 0.0, %v1910
        %v1912 = vpop.f32.mrf.mxu0
        %1913 = vmatprep.mubr.f32.mxu0 0.0
        %1914 = vmatmul.mubr.f32.gmra.mxu0 %v1834
        %v1915 = vpop.f32.mrf.mxu0
        %v1916 = vadd.f32 0.0, %v1915
        %v1917 = vpop.f32.mrf.mxu0
        %1918 = vmatprep.mubr.f32.mxu0 0.0
        %1919 = vmatmul.mubr.f32.gmra.mxu0 %v1837
        %v1920 = vpop.f32.mrf.mxu0
        %v1921 = vadd.f32 0.0, %v1920
        %v1922 = vpop.f32.mrf.mxu0
        %1923 = vdwg.mxu0
        %v1925 = vsel %vm745, %v1250, 0
        %v1928 = vsel %vm745, %v1255, 0
        %v1931 = vsel %vm745, %v1260, 0
        %v1934 = vsel %vm745, %v1265, 0
        %1936 = vmatprep.subr.mxu0 0.0
        %1937 = vmatpush1.msra.mxu0 0.0
        %1938 = vmatprep.subr.mxu0 0.0
        %1939 = vmatpush1.msra.mxu0 0.0
        %1940 = vmatprep.subr.mxu0 0.0
        %1941 = vmatpush1.msra.mxu0 0.0
        %1942 = vmatprep.subr.mxu0 0.0
        %1943 = vmatpush1.msra.mxu0 0.0
        %1944 = vmatprep.subr.mxu0 0.0
        %1945 = vmatpush1.msra.mxu0 0.0
        %1946 = vmatprep.subr.mxu0 0.0
        %1947 = vmatpush1.msra.mxu0 0.0
        %1948 = vmatprep.subr.mxu0 0.0
        %1949 = vmatpush1.msra.mxu0 0.0
        %1950 = vmatprep.subr.mxu0 0.0
        %1951 = vmatpush1.msra.mxu0 0.0
        %1952 = vmatprep.subr.mxu0 0.0
        %1953 = vmatpush1.msra.mxu0 0.0
        %1954 = vmatprep.subr.mxu0 0.0
        %1955 = vmatpush1.msra.mxu0 0.0
        %1956 = vmatprep.subr.mxu0 0.0
        %1957 = vmatpush1.msra.mxu0 0.0
        %1958 = vmatprep.subr.mxu0 0.0
        %1959 = vmatpush1.msra.mxu0 0.0
        %1960 = vmatprep.subr.mxu0 0.0
        %1961 = vmatpush1.msra.mxu0 0.0
        %1962 = vmatprep.subr.mxu0 0.0
        %1963 = vmatpush1.msra.mxu0 0.0
        %1964 = vmatprep.subr.mxu0 0.0
        %1965 = vmatpush1.msra.mxu0 0.0
        %1966 = vmatprep.subr.mxu0 0.0
        %1967 = vmatpush1.msra.mxu0 %v1438
        %1968 = vmatprep.subr.mxu0 0.0
        %1969 = vmatpush2.msra.mxu0 0.0
        %1970 = vmatprep.subr.mxu0 0.0
        %1971 = vmatpush2.msra.mxu0 0.0
        %1972 = vmatprep.subr.mxu0 0.0
        %1973 = vmatpush2.msra.mxu0 0.0
        %1974 = vmatprep.subr.mxu0 0.0
        %1975 = vmatpush2.msra.mxu0 0.0
        %1976 = vmatprep.subr.mxu0 0.0
        %1977 = vmatpush2.msra.mxu0 0.0
        %1978 = vmatprep.subr.mxu0 0.0
        %1979 = vmatpush2.msra.mxu0 0.0
        %1980 = vmatprep.subr.mxu0 0.0
        %1981 = vmatpush2.msra.mxu0 0.0
        %1982 = vmatprep.subr.mxu0 0.0
        %1983 = vmatpush2.msra.mxu0 0.0
        %1984 = vmatprep.subr.mxu0 0.0
        %1985 = vmatpush2.msra.mxu0 0.0
        %1986 = vmatprep.subr.mxu0 0.0
        %1987 = vmatpush2.msra.mxu0 0.0
        %1988 = vmatprep.subr.mxu0 0.0
        %1989 = vmatpush2.msra.mxu0 0.0
        %1990 = vmatprep.subr.mxu0 0.0
        %1991 = vmatpush2.msra.mxu0 0.0
        %1992 = vmatprep.subr.mxu0 0.0
        %1993 = vmatpush2.msra.mxu0 0.0
        %1994 = vmatprep.subr.mxu0 0.0
        %1995 = vmatpush2.msra.mxu0 0.0
        %1996 = vmatprep.subr.mxu0 0.0
        %1997 = vmatpush2.msra.mxu0 0.0
        %1998 = vmatprep.subr.mxu0 0.0
        %1999 = vmatpush2.msra.mxu0 0.0
        %2000 = vmatprep.mubr.f32.mxu0 0.0
        %2001 = vmatmul.mubr.f32.gmra.mxu0 %v1925
        %v2002 = vpop.f32.mrf.mxu0
        %v2003 = vadd.f32 0.0, %v2002
        %v2004 = vpop.f32.mrf.mxu0
        %2005 = vmatprep.mubr.f32.mxu0 0.0
        %2006 = vmatmul.mubr.f32.gmra.mxu0 %v1928
        %v2007 = vpop.f32.mrf.mxu0
        %v2008 = vadd.f32 0.0, %v2007
        %v2009 = vpop.f32.mrf.mxu0
        %2010 = vmatprep.mubr.f32.mxu0 0.0
        %2011 = vmatmul.mubr.f32.gmra.mxu0 %v1931
        %v2012 = vpop.f32.mrf.mxu0
        %v2013 = vadd.f32 0.0, %v2012
        %v2014 = vpop.f32.mrf.mxu0
        %2015 = vmatprep.mubr.f32.mxu0 0.0
        %2016 = vmatmul.mubr.f32.gmra.mxu0 %v1934
        %v2017 = vpop.f32.mrf.mxu0
        %v2018 = vadd.f32 0.0, %v2017
        %v2019 = vpop.f32.mrf.mxu0
        %2020 = vdwg.mxu0
        %v2022 = vsel %vm745, %v1335, 0
        %v2025 = vsel %vm745, %v1340, 0
        %v2028 = vsel %vm745, %v1345, 0
        %v2031 = vsel %vm745, %v1350, 0
        %2033 = vmatprep.subr.mxu0 0.0
        %2034 = vmatpush1.msra.mxu0 0.0
        %2035 = vmatprep.subr.mxu0 0.0
        %2036 = vmatpush1.msra.mxu0 0.0
        %2037 = vmatprep.subr.mxu0 0.0
        %2038 = vmatpush1.msra.mxu0 0.0
        %2039 = vmatprep.subr.mxu0 0.0
        %2040 = vmatpush1.msra.mxu0 0.0
        %2041 = vmatprep.subr.mxu0 0.0
        %2042 = vmatpush1.msra.mxu0 0.0
        %2043 = vmatprep.subr.mxu0 0.0
        %2044 = vmatpush1.msra.mxu0 0.0
        %2045 = vmatprep.subr.mxu0 0.0
        %2046 = vmatpush1.msra.mxu0 0.0
        %2047 = vmatprep.subr.mxu0 0.0
        %2048 = vmatpush1.msra.mxu0 0.0
        %2049 = vmatprep.subr.mxu0 0.0
        %2050 = vmatpush1.msra.mxu0 0.0
        %2051 = vmatprep.subr.mxu0 0.0
        %2052 = vmatpush1.msra.mxu0 0.0
        %2053 = vmatprep.subr.mxu0 0.0
        %2054 = vmatpush1.msra.mxu0 0.0
        %2055 = vmatprep.subr.mxu0 0.0
        %2056 = vmatpush1.msra.mxu0 0.0
        %2057 = vmatprep.subr.mxu0 0.0
        %2058 = vmatpush1.msra.mxu0 0.0
        %2059 = vmatprep.subr.mxu0 0.0
        %2060 = vmatpush1.msra.mxu0 0.0
        %2061 = vmatprep.subr.mxu0 0.0
        %2062 = vmatpush1.msra.mxu0 0.0
        %2063 = vmatprep.subr.mxu0 0.0
        %2064 = vmatpush1.msra.mxu0 %v1438
        %2065 = vmatprep.subr.mxu0 0.0
        %2066 = vmatpush2.msra.mxu0 0.0
        %2067 = vmatprep.subr.mxu0 0.0
        %2068 = vmatpush2.msra.mxu0 0.0
        %2069 = vmatprep.subr.mxu0 0.0
        %2070 = vmatpush2.msra.mxu0 0.0
        %2071 = vmatprep.subr.mxu0 0.0
        %2072 = vmatpush2.msra.mxu0 0.0
        %2073 = vmatprep.subr.mxu0 0.0
        %2074 = vmatpush2.msra.mxu0 0.0
        %2075 = vmatprep.subr.mxu0 0.0
        %2076 = vmatpush2.msra.mxu0 0.0
        %2077 = vmatprep.subr.mxu0 0.0
        %2078 = vmatpush2.msra.mxu0 0.0
        %2079 = vmatprep.subr.mxu0 0.0
        %2080 = vmatpush2.msra.mxu0 0.0
        %2081 = vmatprep.subr.mxu0 0.0
        %2082 = vmatpush2.msra.mxu0 0.0
        %2083 = vmatprep.subr.mxu0 0.0
        %2084 = vmatpush2.msra.mxu0 0.0
        %2085 = vmatprep.subr.mxu0 0.0
        %2086 = vmatpush2.msra.mxu0 0.0
        %2087 = vmatprep.subr.mxu0 0.0
        %2088 = vmatpush2.msra.mxu0 0.0
        %2089 = vmatprep.subr.mxu0 0.0
        %2090 = vmatpush2.msra.mxu0 0.0
        %2091 = vmatprep.subr.mxu0 0.0
        %2092 = vmatpush2.msra.mxu0 0.0
        %2093 = vmatprep.subr.mxu0 0.0
        %2094 = vmatpush2.msra.mxu0 0.0
        %2095 = vmatprep.subr.mxu0 0.0
        %2096 = vmatpush2.msra.mxu0 0.0
        %2097 = vmatprep.mubr.f32.mxu0 0.0
        %2098 = vmatmul.mubr.f32.gmra.mxu0 %v2022
        %v2099 = vpop.f32.mrf.mxu0
        %v2100 = vadd.f32 0.0, %v2099
        %v2101 = vpop.f32.mrf.mxu0
        %2102 = vmatprep.mubr.f32.mxu0 0.0
        %2103 = vmatmul.mubr.f32.gmra.mxu0 %v2025
        %v2104 = vpop.f32.mrf.mxu0
        %v2105 = vadd.f32 0.0, %v2104
        %v2106 = vpop.f32.mrf.mxu0
        %2107 = vmatprep.mubr.f32.mxu0 0.0
        %2108 = vmatmul.mubr.f32.gmra.mxu0 %v2028
        %v2109 = vpop.f32.mrf.mxu0
        %v2110 = vadd.f32 0.0, %v2109
        %v2111 = vpop.f32.mrf.mxu0
        %2112 = vmatprep.mubr.f32.mxu0 0.0
        %2113 = vmatmul.mubr.f32.gmra.mxu0 %v2031
        %v2114 = vpop.f32.mrf.mxu0
        %v2115 = vadd.f32 0.0, %v2114
        %v2116 = vpop.f32.mrf.mxu0
        %2117 = vdwg.mxu0
        %v2119 = vsel %vm745, %v1420, 0
        %v2122 = vsel %vm745, %v1425, 0
        %v2125 = vsel %vm745, %v1430, 0
        %v2128 = vsel %vm745, %v1435, 0
        %2130 = vmatprep.subr.mxu0 0.0
        %2131 = vmatpush1.msra.mxu0 0.0
        %2132 = vmatprep.subr.mxu0 0.0
        %2133 = vmatpush1.msra.mxu0 0.0
        %2134 = vmatprep.subr.mxu0 0.0
        %2135 = vmatpush1.msra.mxu0 0.0
        %2136 = vmatprep.subr.mxu0 0.0
        %2137 = vmatpush1.msra.mxu0 0.0
        %2138 = vmatprep.subr.mxu0 0.0
        %2139 = vmatpush1.msra.mxu0 0.0
        %2140 = vmatprep.subr.mxu0 0.0
        %2141 = vmatpush1.msra.mxu0 0.0
        %2142 = vmatprep.subr.mxu0 0.0
        %2143 = vmatpush1.msra.mxu0 0.0
        %2144 = vmatprep.subr.mxu0 0.0
        %2145 = vmatpush1.msra.mxu0 0.0
        %2146 = vmatprep.subr.mxu0 0.0
        %2147 = vmatpush1.msra.mxu0 0.0
        %2148 = vmatprep.subr.mxu0 0.0
        %2149 = vmatpush1.msra.mxu0 0.0
        %2150 = vmatprep.subr.mxu0 0.0
        %2151 = vmatpush1.msra.mxu0 0.0
        %2152 = vmatprep.subr.mxu0 0.0
        %2153 = vmatpush1.msra.mxu0 0.0
        %2154 = vmatprep.subr.mxu0 0.0
        %2155 = vmatpush1.msra.mxu0 0.0
        %2156 = vmatprep.subr.mxu0 0.0
        %2157 = vmatpush1.msra.mxu0 0.0
        %2158 = vmatprep.subr.mxu0 0.0
        %2159 = vmatpush1.msra.mxu0 0.0
        %2160 = vmatprep.subr.mxu0 0.0
        %2161 = vmatpush1.msra.mxu0 %v1438
        %2162 = vmatprep.subr.mxu0 0.0
        %2163 = vmatpush2.msra.mxu0 0.0
        %2164 = vmatprep.subr.mxu0 0.0
        %2165 = vmatpush2.msra.mxu0 0.0
        %2166 = vmatprep.subr.mxu0 0.0
        %2167 = vmatpush2.msra.mxu0 0.0
        %2168 = vmatprep.subr.mxu0 0.0
        %2169 = vmatpush2.msra.mxu0 0.0
        %2170 = vmatprep.subr.mxu0 0.0
        %2171 = vmatpush2.msra.mxu0 0.0
        %2172 = vmatprep.subr.mxu0 0.0
        %2173 = vmatpush2.msra.mxu0 0.0
        %2174 = vmatprep.subr.mxu0 0.0
        %2175 = vmatpush2.msra.mxu0 0.0
        %2176 = vmatprep.subr.mxu0 0.0
        %2177 = vmatpush2.msra.mxu0 0.0
        %2178 = vmatprep.subr.mxu0 0.0
        %2179 = vmatpush2.msra.mxu0 0.0
        %2180 = vmatprep.subr.mxu0 0.0
        %2181 = vmatpush2.msra.mxu0 0.0
        %2182 = vmatprep.subr.mxu0 0.0
        %2183 = vmatpush2.msra.mxu0 0.0
        %2184 = vmatprep.subr.mxu0 0.0
        %2185 = vmatpush2.msra.mxu0 0.0
        %2186 = vmatprep.subr.mxu0 0.0
        %2187 = vmatpush2.msra.mxu0 0.0
        %2188 = vmatprep.subr.mxu0 0.0
        %2189 = vmatpush2.msra.mxu0 0.0
        %2190 = vmatprep.subr.mxu0 0.0
        %2191 = vmatpush2.msra.mxu0 0.0
        %2192 = vmatprep.subr.mxu0 0.0
        %2193 = vmatpush2.msra.mxu0 0.0
        %2194 = vmatprep.mubr.f32.mxu0 0.0
        %2195 = vmatmul.mubr.f32.gmra.mxu0 %v2119
        %v2196 = vpop.f32.mrf.mxu0
        %v2197 = vadd.f32 0.0, %v2196
        %v2198 = vpop.f32.mrf.mxu0
        %2199 = vmatprep.mubr.f32.mxu0 0.0
        %2200 = vmatmul.mubr.f32.gmra.mxu0 %v2122
        %v2201 = vpop.f32.mrf.mxu0
        %v2202 = vadd.f32 0.0, %v2201
        %v2203 = vpop.f32.mrf.mxu0
        %2204 = vmatprep.mubr.f32.mxu0 0.0
        %2205 = vmatmul.mubr.f32.gmra.mxu0 %v2125
        %v2206 = vpop.f32.mrf.mxu0
        %v2207 = vadd.f32 0.0, %v2206
        %v2208 = vpop.f32.mrf.mxu0
        %2209 = vmatprep.mubr.f32.mxu0 0.0
        %2210 = vmatmul.mubr.f32.gmra.mxu0 %v2128
        %v2211 = vpop.f32.mrf.mxu0
        %v2212 = vadd.f32 0.0, %v2211
        %v2213 = vpop.f32.mrf.mxu0
        %2214 = vdwg.mxu0
        %vm2215 = vcmask 523264
        %2216 = vst.msk [vmem:[%s231] sm:$0xff] %vm2215, %v1518
        %2217 = vst.msk [vmem:[%s231 + $0x8] sm:$0xff] %vm2215, %v1523
        %2218 = vst.msk [vmem:[%s231 + $0x10] sm:$0xff] %vm2215, %v1528
        %2219 = vst.msk [vmem:[%s231 + $0x18] sm:$0xff] %vm2215, %v1533
        %2220 = vst.msk [vmem:[%s231 + $0x20] sm:$0xff] %vm2215, %v1615
        %2221 = vst.msk [vmem:[%s231 + $0x28] sm:$0xff] %vm2215, %v1620
        %2222 = vst.msk [vmem:[%s231 + $0x30] sm:$0xff] %vm2215, %v1625
        %2223 = vst.msk [vmem:[%s231 + $0x38] sm:$0xff] %vm2215, %v1630
        %2224 = vst.msk [vmem:[%s231 + $0x40] sm:$0xff] %vm2215, %v1712
        %2225 = vst.msk [vmem:[%s231 + $0x48] sm:$0xff] %vm2215, %v1717
        %2226 = vst.msk [vmem:[%s231 + $0x50] sm:$0xff] %vm2215, %v1722
        %2227 = vst.msk [vmem:[%s231 + $0x58] sm:$0xff] %vm2215, %v1727
        %2228 = vst.msk [vmem:[%s231 + $0x60] sm:$0xff] %vm2215, %v1809
        %2229 = vst.msk [vmem:[%s231 + $0x68] sm:$0xff] %vm2215, %v1814
        %2230 = vst.msk [vmem:[%s231 + $0x70] sm:$0xff] %vm2215, %v1819
        %2231 = vst.msk [vmem:[%s231 + $0x78] sm:$0xff] %vm2215, %v1824
        %2232 = vst.msk [vmem:[%s231 + $0x80] sm:$0xff] %vm2215, %v1906
        %2233 = vst.msk [vmem:[%s231 + $0x88] sm:$0xff] %vm2215, %v1911
        %2234 = vst.msk [vmem:[%s231 + $0x90] sm:$0xff] %vm2215, %v1916
        %2235 = vst.msk [vmem:[%s231 + $0x98] sm:$0xff] %vm2215, %v1921
        %2236 = vst.msk [vmem:[%s231 + $0xa0] sm:$0xff] %vm2215, %v2003
        %2237 = vst.msk [vmem:[%s231 + $0xa8] sm:$0xff] %vm2215, %v2008
        %2238 = vst.msk [vmem:[%s231 + $0xb0] sm:$0xff] %vm2215, %v2013
        %2239 = vst.msk [vmem:[%s231 + $0xb8] sm:$0xff] %vm2215, %v2018
        %2240 = vst.msk [vmem:[%s231 + $0xc0] sm:$0xff] %vm2215, %v2100
        %2241 = vst.msk [vmem:[%s231 + $0xc8] sm:$0xff] %vm2215, %v2105
        %2242 = vst.msk [vmem:[%s231 + $0xd0] sm:$0xff] %vm2215, %v2110
        %2243 = vst.msk [vmem:[%s231 + $0xd8] sm:$0xff] %vm2215, %v2115
        %2244 = vst.msk [vmem:[%s231 + $0xe0] sm:$0xff] %vm2215, %v2197
        %2245 = vst.msk [vmem:[%s231 + $0xe8] sm:$0xff] %vm2215, %v2202
        %2246 = vst.msk [vmem:[%s231 + $0xf0] sm:$0xff] %vm2215, %v2207
        %2247 = vst.msk [vmem:[%s231 + $0xf8] sm:$0xff] %vm2215, %v2212
        %s2248 = sand.u32 %s138, 1
        %s2249 = scalar_lea.sflag [#allocation5], %s2248
        %s2250 = sand.u32 %s138, 1
        %s2251 = smul.addr %s2250, 256
        %s2252 = scalar_lea.vmem [#allocation6], %s2251
        // Predicated region
        $region45: #{tpu_custom_call.1} parent=39 // pred_check
          %p2253 = pneg %p148
        $region46: #{tpu_custom_call.1} parent=39 // pred_check_branch
          %2255 = sbr.rel (%p2253) target = $region48
        $region47: #{tpu_custom_call.1} parent=39 // pred_region
          #allocation8 [shape = 'u32[6]{0}', space=smem, size = 0x18, scoped, tag = 'DMA stride descriptor']
          %s2256 = smul.u32 4, %s20
          %s2258 = ssub.s32 4096, 4096
          %2259 = vsyncadd %s2249, %s2258
          %s2260 = smul.addr %s2256, 128
          %s2261 = scalar_lea.hbm %s5, %s2260
          %s2263 = sshll.u32 1, 14
          %s2264 = sxor.u32 4294967295, %s2263
          %s2267 = sshll.u32 7, 18
          %s2268 = sxor.u32 4294967295, %s2267
          %s2269 = sand.u32 0, %s2268
          %s2271 = sor.u32 %s2269, 0
          %s2272 = sshll.u32 %s2252, 4
          %s2273 = int_to_ptr.vmem [resolvable:$true] %s2272
          %2279 = sst [smem:[#allocation8]] 512
          %s2280 = scalar_lea.smem [#allocation8], 1
          %2281 = sst [smem:[%s2280]] 1024
          %s2282 = scalar_lea.smem [#allocation8], 2
          %2283 = sst [smem:[%s2282]] 4
          %s2284 = scalar_lea.smem [#allocation8], 3
          %2285 = sst [smem:[%s2284]] 128
          %s2286 = scalar_lea.smem [#allocation8], 4
          %2287 = sst [smem:[%s2286]] 128
          %s2288 = scalar_lea.smem [#allocation8], 5
          %2289 = sst [smem:[%s2288]] 8
          %2291 = dma.general %s2273, 4096, %s2261, %s2249, 131072, [#allocation8], %s2271, 0
        $region48: #{tpu_custom_call.1} parent=39 // pred_fallthru
          _
      $region40: #{tpu_custom_call.1} parent=5 // pred_fallthru
        _
      %p2292 = scmp.le.s32.totalorder 2, %s15
      // Predicated region
      $region49: #{tpu_custom_call.1} parent=5 // pred_check
        %p2293 = pneg %p2292
      $region50: #{tpu_custom_call.1} parent=5 // pred_check_branch
        %2295 = sbr.rel (%p2293) target = $region52
      $region51: #{tpu_custom_call.1} parent=5 // pred_region
        %s2296 = ssub.s32 %s15, 2
        // Predicated region
        $region53: #{tpu_custom_call.1} parent=51 // pred_check
          %p2297 = pneg %p154
        $region54: #{tpu_custom_call.1} parent=51 // pred_check_branch
          %2299 = sbr.rel (%p2297) target = $region56
        $region55: #{tpu_custom_call.1} parent=51 // pred_region
          %s2300 = sand.u32 %s139, 1
          %s2301 = scalar_lea.sflag [#allocation5], %s2300
          %s2302 = sand.u32 %s139, 1
          %s2303 = smul.addr %s2302, 256
          %s2304 = scalar_lea.vmem [#allocation6], %s2303
          %2305 = dma.done %s2301, 4096
        $region56: #{tpu_custom_call.1} parent=51 // pred_fallthru
          _
      $region52: #{tpu_custom_call.1} parent=5 // pred_fallthru
        _
    $region6: #{tpu_custom_call.1} parent=1 // loop_footer
      %s19 = sadd.s32 1, %s15
    $region7: #{tpu_custom_call.1} parent=1 // loop_footer_branch
      %14 = sbr.rel target = $region3
    $region8: #{tpu_custom_call.1} parent=1 // loop_exit
      _
    %2306 = vsyncpa [#allocation4], 1
    %s2307 = scalar_lea.sflag [#allocation4], 1
    %2308 = vsyncpa %s2307, 1
    %2309 = vsyncpa [#allocation5], 1
    %s2310 = scalar_lea.sflag [#allocation5], 1
    %2311 = vsyncpa %s2310, 1

</llo_original>
